<compile_context>
chip_gen: v7x
topology: tpu7x:2x2x1
jax: 0.10.0
libtpu: 0.0.40
codegen_flags: <defaults>
</compile_context>

<pallas_src>
import functools
import math

import jax
import jax.numpy as jnp
from jax.experimental import pallas as pl
from jax.experimental.pallas import tpu as pltpu


# ----------------------------------------------------------------------------
# Fused encoder kernel: one grid step = (one batch item, one encoder layer)
# ----------------------------------------------------------------------------
def fused_encoder_kernel(
    emb_ref, pe_ref, wp_ref, gvec_ref,
    wqkv_ref, wo_ref, w1_ref, w2_ref, b1_ref, lvec_ref,
    o_ref, x_ref,
    *, n_head, d_model, scale_emb, scale_attn,
):
    f32 = jnp.float32
    bf16 = jnp.bfloat16
    li = pl.program_id(1)
    n_layers = pl.num_programs(1)
    s_len = o_ref.shape[1]
    dh = d_model // n_head

    def layer_norm(x, g, b):
        mu = jnp.mean(x, axis=-1, keepdims=True)
        var = jnp.mean((x - mu) ** 2, axis=-1, keepdims=True)
        return (x - mu) * jax.lax.rsqrt(var + 1e-5) * g + b

    lane = jax.lax.broadcasted_iota(jnp.int32, (1, d_model), 1)

    # --- layer-0 prologue: emb_proj, * sqrt(d_model), + positional encoding --
    @pl.when(li == 0)
    def _():
        bp = gvec_ref[0:1, :]
        x0 = jnp.dot(emb_ref[0].astype(bf16), wp_ref[...],
                     preferred_element_type=f32)
        x_ref[...] = (x0 + bp) * scale_emb + pe_ref[...]

    x = x_ref[...]

    # --- per-layer packed bias / LayerNorm vectors (one (9, D) slab) ---------
    lv = lvec_ref[0]
    bq, bk, bv = lv[0:1], lv[1:2], lv[2:3]
    bo, b2 = lv[3:4], lv[4:5]
    ln1g, ln1b, ln2g, ln2b = lv[5:6], lv[6:7], lv[7:8], lv[8:9]

    # --- multi-head self-attention (batch-local: no mask needed) -------------
    qkv = jnp.dot(x.astype(bf16), wqkv_ref[0], preferred_element_type=f32)
    q = (qkv[:, :d_model] + bq) * scale_attn          # scale folded into q
    k = qkv[:, d_model:2 * d_model] + bk
    v = qkv[:, 2 * d_model:] + bv
    kb = k.astype(bf16)

    attn = jnp.zeros((s_len, d_model), f32)
    for h in range(n_head):
        hm = ((lane >= h * dh) & (lane < (h + 1) * dh)).astype(f32)
        # Contracting the feature axis of (q*hm) with (unmasked) k equals
        # q_h @ k_h.T for this head -- masked lanes contribute zero, so there
        # is no in-kernel transpose and no per-head gather.
        s = jax.lax.dot_general((q * hm).astype(bf16), kb,
                                (((1,), (1,)), ((), ())),
                                preferred_element_type=f32)
        s = s - jnp.max(s, axis=-1, keepdims=True)
        p = jnp.exp(s)
        p = p * pl.reciprocal(jnp.sum(p, axis=-1, keepdims=True), approx=True)
        # Masked V keeps only this head's output lanes; summing over heads
        # reproduces the concat-heads result with no scatter/concat.
        attn = attn + jnp.dot(p.astype(bf16), (v * hm).astype(bf16),
                              preferred_element_type=f32)

    attn = jnp.dot(attn.astype(bf16), wo_ref[0],
                   preferred_element_type=f32) + bo
    x = layer_norm(x + attn, ln1g, ln1b)              # residual + LN1

    # --- feed-forward: relu(x @ w1 + b1) @ w2 + b2 ---------------------------
    hmid = jnp.dot(x.astype(bf16), w1_ref[0],
                   preferred_element_type=f32) + b1_ref[0]
    hmid = jnp.maximum(hmid, 0.0)
    ffn = jnp.dot(hmid.astype(bf16), w2_ref[0],
                  preferred_element_type=f32) + b2
    x = layer_norm(x + ffn, ln2g, ln2b)               # residual + LN2
    x_ref[...] = x

    # --- final LayerNorm epilogue, written once on the last layer ------------
    @pl.when(li == n_layers - 1)
    def _():
        fing = gvec_ref[1:2, :]
        finb = gvec_ref[2:3, :]
        o_ref[0] = layer_norm(x, fing, finb).astype(o_ref.dtype)


# ----------------------------------------------------------------------------
# Model glue (parameter setup, packing, pallas_call)
# ----------------------------------------------------------------------------
def make_positional_encoding(max_len, d_model):
    position = jnp.arange(max_len, dtype=jnp.float32)[:, None]
    div_term = jnp.exp(
        jnp.arange(0, d_model, 2, dtype=jnp.float32)
        * (-math.log(10000.0) / d_model)
    )
    pe = jnp.zeros((max_len, d_model), dtype=jnp.float32)
    pe = pe.at[:, 0::2].set(jnp.sin(position * div_term))
    pe = pe.at[:, 1::2].set(jnp.cos(position * div_term))
    return pe[:, None, :]  # (max_len, 1, d_model)


def init_params(key, vocab, text_emb_dim, n_input, n_head, n_hid, n_layers):
    def dense(key, shape):
        return 0.02 * jax.random.normal(key, shape, dtype=jnp.float32)

    keys = jax.random.split(key, 3 + n_layers)
    params = {
        "embedding": dense(keys[0], (vocab, text_emb_dim)),
        "emb_proj_w": dense(keys[1], (text_emb_dim, n_input)),
        "emb_proj_b": jnp.zeros((n_input,), jnp.float32),
        "final_ln_g": jnp.ones((n_input,), jnp.float32),
        "final_ln_b": jnp.zeros((n_input,), jnp.float32),
        "layers": [],
    }
    for l in range(n_layers):
        lk = jax.random.split(keys[3 + l], 6)
        params["layers"].append({
            "wq": dense(lk[0], (n_input, n_input)),
            "wk": dense(lk[1], (n_input, n_input)),
            "wv": dense(lk[2], (n_input, n_input)),
            "bq": jnp.zeros((n_input,), jnp.float32),
            "bk": jnp.zeros((n_input,), jnp.float32),
            "bv": jnp.zeros((n_input,), jnp.float32),
            "wo": dense(lk[3], (n_input, n_input)),
            "bo": jnp.zeros((n_input,), jnp.float32),
            "w1": dense(lk[4], (n_input, n_hid)),
            "b1": jnp.zeros((n_hid,), jnp.float32),
            "w2": dense(lk[5], (n_hid, n_input)),
            "b2": jnp.zeros((n_input,), jnp.float32),
            "ln1_g": jnp.ones((n_input,), jnp.float32),
            "ln1_b": jnp.zeros((n_input,), jnp.float32),
            "ln2_g": jnp.ones((n_input,), jnp.float32),
            "ln2_b": jnp.zeros((n_input,), jnp.float32),
        })
    return params


def transformer_encoder_forward(src_tokens, params, pe, *, n_input, n_head):
    # src_tokens: (S, B) int32 ; sequence-first like PyTorch batch_first=False
    s, b = src_tokens.shape
    d = n_input
    layers = params["layers"]
    n_layers = len(layers)
    e_dim = params["embedding"].shape[1]
    n_hid = layers[0]["w1"].shape[1]
    bf16 = jnp.bfloat16

    # --- JAX glue: embedding gather, batch-major token slab ------------------
    emb = jnp.take(params["embedding"], src_tokens.T.reshape(-1), axis=0)
    emb = emb.reshape(b, s, e_dim)                    # (B, S, E)
    pe_sd = pe[:s, 0, :]                              # (S, D)

    # --- weights: bf16 MXU operands, per-layer stacks, packed small vectors --
    wp = params["emb_proj_w"].astype(bf16)                            # (E, D)
    wqkv = jnp.stack([jnp.concatenate([p["wq"], p["wk"], p["wv"]], axis=1)
                      for p in layers]).astype(bf16)                  # (L, D, 3D)
    wo = jnp.stack([p["wo"] for p in layers]).astype(bf16)            # (L, D, D)
    w1 = jnp.stack([p["w1"] for p in layers]).astype(bf16)            # (L, D, H)
    w2 = jnp.stack([p["w2"] for p in layers]).astype(bf16)            # (L, H, D)
    b1 = jnp.stack([p["b1"][None] for p in layers])                   # (L, 1, H)
    lvec = jnp.stack([jnp.stack([p["bq"], p["bk"], p["bv"], p["bo"], p["b2"],
                                 p["ln1_g"], p["ln1_b"], p["ln2_g"], p["ln2_b"]])
                      for p in layers])                               # (L, 9, D)
    gvec = jnp.stack([params["emb_proj_b"],
                      params["final_ln_g"], params["final_ln_b"]])    # (3, D)

    kernel = functools.partial(
        fused_encoder_kernel,
        n_head=n_head, d_model=d,
        scale_emb=math.sqrt(d), scale_attn=1.0 / math.sqrt(d // n_head),
    )

    out = pl.pallas_call(
        kernel,
        out_shape=jax.ShapeDtypeStruct((b, s, d), jnp.float32),
        grid_spec=pltpu.PrefetchScalarGridSpec(
            num_scalar_prefetch=0,
            grid=(b, n_layers),
            in_specs=[
                pl.BlockSpec((1, s, e_dim), lambda bi, li: (bi, 0, 0)),  # emb
                pl.BlockSpec((s, d),        lambda bi, li: (0, 0)),      # pe
                pl.BlockSpec((e_dim, d),    lambda bi, li: (0, 0)),      # wp
                pl.BlockSpec((3, d),        lambda bi, li: (0, 0)),      # gvec
                pl.BlockSpec((1, d, 3 * d), lambda bi, li: (li, 0, 0)),  # wqkv
                pl.BlockSpec((1, d, d),     lambda bi, li: (li, 0, 0)),  # wo
                pl.BlockSpec((1, d, n_hid), lambda bi, li: (li, 0, 0)),  # w1
                pl.BlockSpec((1, n_hid, d), lambda bi, li: (li, 0, 0)),  # w2
                pl.BlockSpec((1, 1, n_hid), lambda bi, li: (li, 0, 0)),  # b1
                pl.BlockSpec((1, 9, d),     lambda bi, li: (li, 0, 0)),  # lvec
            ],
            out_specs=pl.BlockSpec((1, s, d), lambda bi, li: (bi, 0, 0)),
            scratch_shapes=[pltpu.VMEM((s, d), jnp.float32)],
        ),
        compiler_params=pltpu.CompilerParams(
            dimension_semantics=("parallel", "arbitrary")),
    )(emb, pe_sd, wp, gvec, wqkv, wo, w1, w2, b1, lvec)

    # back to PyTorch's sequence-first (S, B, D) layout
    return out.transpose(1, 0, 2)


if __name__ == "__main__":
    SEQ, BATCH = 8, 2
    VOCAB, TEXT_EMB_DIM = 50, 16
    N_INPUT, N_HEAD, N_HID, N_LAYERS = 32, 4, 64, 2

    key = jax.random.PRNGKey(0)
    k_param, k_tok = jax.random.split(key)
    params = init_params(k_param, VOCAB, TEXT_EMB_DIM, N_INPUT, N_HEAD, N_HID,
                         N_LAYERS)
    pe = make_positional_encoding(5000, N_INPUT)
    src = jax.random.randint(k_tok, (SEQ, BATCH), 0, VOCAB, dtype=jnp.int32)

    forward = jax.jit(functools.partial(
        transformer_encoder_forward, n_input=N_INPUT, n_head=N_HEAD))
    out = jax.block_until_ready(forward(src, params, pe))

    assert out.shape == (SEQ, BATCH, N_INPUT)
    assert bool(jnp.all(jnp.isfinite(out)))
    print("KERNEL_OK")
</pallas_src>

<mosaic_0001>
module attributes {stable_mosaic.version = 11 : i64} {
  func.func @fused_encoder_kernel(%arg0: i32, %arg1: i32, %arg2: memref<1x8x16xf32, #tpu.memory_space<vmem>>, %arg3: memref<8x32xf32, #tpu.memory_space<vmem>>, %arg4: memref<16x32xbf16, #tpu.memory_space<vmem>>, %arg5: memref<3x32xf32, #tpu.memory_space<vmem>>, %arg6: memref<1x32x96xbf16, #tpu.memory_space<vmem>>, %arg7: memref<1x32x32xbf16, #tpu.memory_space<vmem>>, %arg8: memref<1x32x64xbf16, #tpu.memory_space<vmem>>, %arg9: memref<1x64x32xbf16, #tpu.memory_space<vmem>>, %arg10: memref<1x1x64xf32, #tpu.memory_space<vmem>>, %arg11: memref<1x9x32xf32, #tpu.memory_space<vmem>>, %arg12: memref<1x8x32xf32, #tpu.memory_space<vmem>>, %arg13: memref<8x32xf32, #tpu.memory_space<vmem>>) attributes {dimension_semantics = [#tpu.dimension_semantics<parallel>, #tpu.dimension_semantics<arbitrary>], iteration_bounds = array<i64: 2, 2>, scalar_prefetch = 0 : i64, scratch_operands = 1 : i64, tpu.core_type = #tpu.core_type<tc>, window_params = [{transform_indices = @transform_0, window_bounds = array<i64: 1, 8, 16>}, {pipeline_mode = #tpu.pipeline_mode<synchronous>, transform_indices = @transform_1, window_bounds = array<i64: 8, 32>}, {pipeline_mode = #tpu.pipeline_mode<synchronous>, transform_indices = @transform_2, window_bounds = array<i64: 16, 32>}, {pipeline_mode = #tpu.pipeline_mode<synchronous>, transform_indices = @transform_3, window_bounds = array<i64: 3, 32>}, {transform_indices = @transform_4, window_bounds = array<i64: 1, 32, 96>}, {transform_indices = @transform_5, window_bounds = array<i64: 1, 32, 32>}, {transform_indices = @transform_6, window_bounds = array<i64: 1, 32, 64>}, {transform_indices = @transform_7, window_bounds = array<i64: 1, 64, 32>}, {transform_indices = @transform_8, window_bounds = array<i64: 1, 1, 64>}, {transform_indices = @transform_9, window_bounds = array<i64: 1, 9, 32>}, {transform_indices = @transform_10, window_bounds = array<i64: 1, 8, 32>}]} {
    %0 = tpu.iota {dimensions = array<i32: 1>} : vector<1x32xi32>
    %c0_i32 = arith.constant 0 : i32
    %1 = arith.cmpi eq, %arg1, %c0_i32 : i32
    %2 = arith.extui %1 : i1 to i32
    %c0_i32_0 = arith.constant 0 : i32
    %3 = arith.cmpi ne, %2, %c0_i32_0 : i32
    scf.if %3 {
      %c0_59 = arith.constant 0 : index
      %c0_60 = arith.constant 0 : index
      %213 = vector.load %arg5[%c0_59, %c0_60] : memref<3x32xf32, #tpu.memory_space<vmem>>, vector<1x32xf32>
      %c0_61 = arith.constant 0 : index
      %c0_62 = arith.constant 0 : index
      %c0_63 = arith.constant 0 : index
      %214 = vector.load %arg2[%c0_61, %c0_62, %c0_63] : memref<1x8x16xf32, #tpu.memory_space<vmem>>, vector<1x8x16xf32>
      %215 = vector.shape_cast %214 : vector<1x8x16xf32> to vector<8x16xf32>
      %216 = arith.truncf %215 : vector<8x16xf32> to vector<8x16xbf16>
      %c0_64 = arith.constant 0 : index
      %c0_65 = arith.constant 0 : index
      %217 = vector.load %arg4[%c0_64, %c0_65] : memref<16x32xbf16, #tpu.memory_space<vmem>>, vector<16x32xbf16>
      %cst_66 = arith.constant dense<0.000000e+00> : vector<8x32xf32>
      %218 = tpu.matmul %216, %217, %cst_66 {dimension_numbers = #tpu.dot_dimension_numbers<[1], [0], [0], [1], [0, 0, 1, 1], [], []>} : vector<8x16xbf16>, vector<16x32xbf16>, vector<8x32xf32> -> vector<8x32xf32>
      %219 = vector.broadcast %213 : vector<1x32xf32> to vector<8x32xf32>
      %220 = arith.addf %218, %219 : vector<8x32xf32>
      %cst_67 = arith.constant 5.65685415 : f32
      %221 = vector.broadcast %cst_67 : f32 to vector<8x32xf32>
      %222 = arith.mulf %220, %221 : vector<8x32xf32>
      %c0_68 = arith.constant 0 : index
      %c0_69 = arith.constant 0 : index
      %223 = vector.load %arg3[%c0_68, %c0_69] : memref<8x32xf32, #tpu.memory_space<vmem>>, vector<8x32xf32>
      %224 = arith.addf %222, %223 : vector<8x32xf32>
      %c0_70 = arith.constant 0 : index
      %c0_71 = arith.constant 0 : index
      %225 = vector.load %arg13[%c0_70, %c0_71] : memref<8x32xf32, #tpu.memory_space<vmem>>, vector<8x32xf32>
      tpu.vector_store %arg13[%c0_70, %c0_71], %224 {strides = array<i32>} : memref<8x32xf32, #tpu.memory_space<vmem>>, vector<8x32xf32>,
    } else {
    }
    %c0 = arith.constant 0 : index
    %c0_1 = arith.constant 0 : index
    %4 = vector.load %arg13[%c0, %c0_1] : memref<8x32xf32, #tpu.memory_space<vmem>>, vector<8x32xf32>
    %c0_2 = arith.constant 0 : index
    %c0_3 = arith.constant 0 : index
    %c0_4 = arith.constant 0 : index
    %5 = vector.load %arg11[%c0_2, %c0_3, %c0_4] : memref<1x9x32xf32, #tpu.memory_space<vmem>>, vector<1x9x32xf32>
    %6 = vector.shape_cast %5 : vector<1x9x32xf32> to vector<9x32xf32>
    %7 = vector.extract_strided_slice %6 {offsets = [0, 0], sizes = [1, 32], strides = [1, 1]} : vector<9x32xf32> to vector<1x32xf32>
    %8 = vector.extract_strided_slice %6 {offsets = [1, 0], sizes = [1, 32], strides = [1, 1]} : vector<9x32xf32> to vector<1x32xf32>
    %9 = vector.extract_strided_slice %6 {offsets = [2, 0], sizes = [1, 32], strides = [1, 1]} : vector<9x32xf32> to vector<1x32xf32>
    %10 = vector.extract_strided_slice %6 {offsets = [3, 0], sizes = [1, 32], strides = [1, 1]} : vector<9x32xf32> to vector<1x32xf32>
    %11 = vector.extract_strided_slice %6 {offsets = [4, 0], sizes = [1, 32], strides = [1, 1]} : vector<9x32xf32> to vector<1x32xf32>
    %12 = vector.extract_strided_slice %6 {offsets = [5, 0], sizes = [1, 32], strides = [1, 1]} : vector<9x32xf32> to vector<1x32xf32>
    %13 = vector.extract_strided_slice %6 {offsets = [6, 0], sizes = [1, 32], strides = [1, 1]} : vector<9x32xf32> to vector<1x32xf32>
    %14 = vector.extract_strided_slice %6 {offsets = [7, 0], sizes = [1, 32], strides = [1, 1]} : vector<9x32xf32> to vector<1x32xf32>
    %15 = vector.extract_strided_slice %6 {offsets = [8, 0], sizes = [1, 32], strides = [1, 1]} : vector<9x32xf32> to vector<1x32xf32>
    %16 = arith.truncf %4 : vector<8x32xf32> to vector<8x32xbf16>
    %c0_5 = arith.constant 0 : index
    %c0_6 = arith.constant 0 : index
    %c0_7 = arith.constant 0 : index
    %17 = vector.load %arg6[%c0_5, %c0_6, %c0_7] : memref<1x32x96xbf16, #tpu.memory_space<vmem>>, vector<1x32x96xbf16>
    %18 = vector.shape_cast %17 : vector<1x32x96xbf16> to vector<32x96xbf16>
    %cst = arith.constant dense<0.000000e+00> : vector<8x96xf32>
    %19 = tpu.matmul %16, %18, %cst {dimension_numbers = #tpu.dot_dimension_numbers<[1], [0], [0], [1], [0, 0, 1, 1], [], []>} : vector<8x32xbf16>, vector<32x96xbf16>, vector<8x96xf32> -> vector<8x96xf32>
    %20 = vector.extract_strided_slice %19 {offsets = [0, 0], sizes = [8, 32], strides = [1, 1]} : vector<8x96xf32> to vector<8x32xf32>
    %21 = vector.broadcast %7 : vector<1x32xf32> to vector<8x32xf32>
    %22 = arith.addf %20, %21 : vector<8x32xf32>
    %cst_8 = arith.constant 0.353553385 : f32
    %23 = vector.broadcast %cst_8 : f32 to vector<8x32xf32>
    %24 = arith.mulf %22, %23 : vector<8x32xf32>
    %25 = vector.extract_strided_slice %19 {offsets = [0, 32], sizes = [8, 32], strides = [1, 1]} : vector<8x96xf32> to vector<8x32xf32>
    %26 = vector.broadcast %8 : vector<1x32xf32> to vector<8x32xf32>
    %27 = arith.addf %25, %26 : vector<8x32xf32>
    %28 = vector.extract_strided_slice %19 {offsets = [0, 64], sizes = [8, 32], strides = [1, 1]} : vector<8x96xf32> to vector<8x32xf32>
    %29 = vector.broadcast %9 : vector<1x32xf32> to vector<8x32xf32>
    %30 = arith.addf %28, %29 : vector<8x32xf32>
    %31 = arith.truncf %27 : vector<8x32xf32> to vector<8x32xbf16>
    %cst_9 = arith.constant 0.000000e+00 : f32
    %32 = vector.broadcast %cst_9 : f32 to vector<8x32xf32>
    %c0_i32_10 = arith.constant 0 : i32
    %33 = vector.broadcast %c0_i32_10 : i32 to vector<1x32xi32>
    %34 = arith.cmpi sge, %0, %33 : vector<1x32xi32>
    %c8_i32 = arith.constant 8 : i32
    %35 = vector.broadcast %c8_i32 : i32 to vector<1x32xi32>
    %36 = arith.cmpi slt, %0, %35 : vector<1x32xi32>
    %37 = arith.andi %34, %36 : vector<1x32xi1>
    %38 = arith.extui %37 : vector<1x32xi1> to vector<1x32xi32>
    %39 = arith.sitofp %38 : vector<1x32xi32> to vector<1x32xf32>
    %40 = vector.broadcast %39 : vector<1x32xf32> to vector<8x32xf32>
    %41 = arith.mulf %24, %40 : vector<8x32xf32>
    %42 = arith.truncf %41 : vector<8x32xf32> to vector<8x32xbf16>
    %cst_11 = arith.constant dense<0.000000e+00> : vector<8x8xf32>
    %43 = tpu.matmul %42, %31, %cst_11 {dimension_numbers = #tpu.dot_dimension_numbers<[1], [1], [0], [0], [0, 0, 1, 0], [], []>} : vector<8x32xbf16>, vector<8x32xbf16>, vector<8x8xf32> -> vector<8x8xf32>
    %cst_12 = arith.constant dense<0xFF800000> : vector<8xf32>
    %44 = vector.multi_reduction <maximumf>, %43, %cst_12 [1] : vector<8x8xf32> to vector<8xf32>
    %45 = vector.shape_cast %44 : vector<8xf32> to vector<8x1xf32>
    %46 = vector.broadcast %45 : vector<8x1xf32> to vector<8x8xf32>
    %47 = arith.subf %43, %46 : vector<8x8xf32>
    %48 = math.exp %47 : vector<8x8xf32>
    %cst_13 = arith.constant dense<0.000000e+00> : vector<8xf32>
    %49 = vector.multi_reduction <add>, %48, %cst_13 [1] : vector<8x8xf32> to vector<8xf32>
    %50 = vector.shape_cast %49 : vector<8xf32> to vector<8x1xf32>
    %51 = tpu.reciprocal %50 {approx = true} : vector<8x1xf32> -> vector<8x1xf32>
    %52 = vector.broadcast %51 : vector<8x1xf32> to vector<8x8xf32>
    %53 = arith.mulf %48, %52 : vector<8x8xf32>
    %54 = arith.truncf %53 : vector<8x8xf32> to vector<8x8xbf16>
    %55 = vector.broadcast %39 : vector<1x32xf32> to vector<8x32xf32>
    %56 = arith.mulf %30, %55 : vector<8x32xf32>
    %57 = arith.truncf %56 : vector<8x32xf32> to vector<8x32xbf16>
    %cst_14 = arith.constant dense<0.000000e+00> : vector<8x32xf32>
    %58 = tpu.matmul %54, %57, %cst_14 {dimension_numbers = #tpu.dot_dimension_numbers<[1], [0], [0], [1], [0, 0, 1, 1], [], []>} : vector<8x8xbf16>, vector<8x32xbf16>, vector<8x32xf32> -> vector<8x32xf32>
    %59 = arith.addf %32, %58 : vector<8x32xf32>
    %c8_i32_15 = arith.constant 8 : i32
    %60 = vector.broadcast %c8_i32_15 : i32 to vector<1x32xi32>
    %61 = arith.cmpi sge, %0, %60 : vector<1x32xi32>
    %c16_i32 = arith.constant 16 : i32
    %62 = vector.broadcast %c16_i32 : i32 to vector<1x32xi32>
    %63 = arith.cmpi slt, %0, %62 : vector<1x32xi32>
    %64 = arith.andi %61, %63 : vector<1x32xi1>
    %65 = arith.extui %64 : vector<1x32xi1> to vector<1x32xi32>
    %66 = arith.sitofp %65 : vector<1x32xi32> to vector<1x32xf32>
    %67 = vector.broadcast %66 : vector<1x32xf32> to vector<8x32xf32>
    %68 = arith.mulf %24, %67 : vector<8x32xf32>
    %69 = arith.truncf %68 : vector<8x32xf32> to vector<8x32xbf16>
    %cst_16 = arith.constant dense<0.000000e+00> : vector<8x8xf32>
    %70 = tpu.matmul %69, %31, %cst_16 {dimension_numbers = #tpu.dot_dimension_numbers<[1], [1], [0], [0], [0, 0, 1, 0], [], []>} : vector<8x32xbf16>, vector<8x32xbf16>, vector<8x8xf32> -> vector<8x8xf32>
    %cst_17 = arith.constant dense<0xFF800000> : vector<8xf32>
    %71 = vector.multi_reduction <maximumf>, %70, %cst_17 [1] : vector<8x8xf32> to vector<8xf32>
    %72 = vector.shape_cast %71 : vector<8xf32> to vector<8x1xf32>
    %73 = vector.broadcast %72 : vector<8x1xf32> to vector<8x8xf32>
    %74 = arith.subf %70, %73 : vector<8x8xf32>
    %75 = math.exp %74 : vector<8x8xf32>
    %cst_18 = arith.constant dense<0.000000e+00> : vector<8xf32>
    %76 = vector.multi_reduction <add>, %75, %cst_18 [1] : vector<8x8xf32> to vector<8xf32>
    %77 = vector.shape_cast %76 : vector<8xf32> to vector<8x1xf32>
    %78 = tpu.reciprocal %77 {approx = true} : vector<8x1xf32> -> vector<8x1xf32>
    %79 = vector.broadcast %78 : vector<8x1xf32> to vector<8x8xf32>
    %80 = arith.mulf %75, %79 : vector<8x8xf32>
    %81 = arith.truncf %80 : vector<8x8xf32> to vector<8x8xbf16>
    %82 = vector.broadcast %66 : vector<1x32xf32> to vector<8x32xf32>
    %83 = arith.mulf %30, %82 : vector<8x32xf32>
    %84 = arith.truncf %83 : vector<8x32xf32> to vector<8x32xbf16>
    %cst_19 = arith.constant dense<0.000000e+00> : vector<8x32xf32>
    %85 = tpu.matmul %81, %84, %cst_19 {dimension_numbers = #tpu.dot_dimension_numbers<[1], [0], [0], [1], [0, 0, 1, 1], [], []>} : vector<8x8xbf16>, vector<8x32xbf16>, vector<8x32xf32> -> vector<8x32xf32>
    %86 = arith.addf %59, %85 : vector<8x32xf32>
    %c16_i32_20 = arith.constant 16 : i32
    %87 = vector.broadcast %c16_i32_20 : i32 to vector<1x32xi32>
    %88 = arith.cmpi sge, %0, %87 : vector<1x32xi32>
    %c24_i32 = arith.constant 24 : i32
    %89 = vector.broadcast %c24_i32 : i32 to vector<1x32xi32>
    %90 = arith.cmpi slt, %0, %89 : vector<1x32xi32>
    %91 = arith.andi %88, %90 : vector<1x32xi1>
    %92 = arith.extui %91 : vector<1x32xi1> to vector<1x32xi32>
    %93 = arith.sitofp %92 : vector<1x32xi32> to vector<1x32xf32>
    %94 = vector.broadcast %93 : vector<1x32xf32> to vector<8x32xf32>
    %95 = arith.mulf %24, %94 : vector<8x32xf32>
    %96 = arith.truncf %95 : vector<8x32xf32> to vector<8x32xbf16>
    %cst_21 = arith.constant dense<0.000000e+00> : vector<8x8xf32>
    %97 = tpu.matmul %96, %31, %cst_21 {dimension_numbers = #tpu.dot_dimension_numbers<[1], [1], [0], [0], [0, 0, 1, 0], [], []>} : vector<8x32xbf16>, vector<8x32xbf16>, vector<8x8xf32> -> vector<8x8xf32>
    %cst_22 = arith.constant dense<0xFF800000> : vector<8xf32>
    %98 = vector.multi_reduction <maximumf>, %97, %cst_22 [1] : vector<8x8xf32> to vector<8xf32>
    %99 = vector.shape_cast %98 : vector<8xf32> to vector<8x1xf32>
    %100 = vector.broadcast %99 : vector<8x1xf32> to vector<8x8xf32>
    %101 = arith.subf %97, %100 : vector<8x8xf32>
    %102 = math.exp %101 : vector<8x8xf32>
    %cst_23 = arith.constant dense<0.000000e+00> : vector<8xf32>
    %103 = vector.multi_reduction <add>, %102, %cst_23 [1] : vector<8x8xf32> to vector<8xf32>
    %104 = vector.shape_cast %103 : vector<8xf32> to vector<8x1xf32>
    %105 = tpu.reciprocal %104 {approx = true} : vector<8x1xf32> -> vector<8x1xf32>
    %106 = vector.broadcast %105 : vector<8x1xf32> to vector<8x8xf32>
    %107 = arith.mulf %102, %106 : vector<8x8xf32>
    %108 = arith.truncf %107 : vector<8x8xf32> to vector<8x8xbf16>
    %109 = vector.broadcast %93 : vector<1x32xf32> to vector<8x32xf32>
    %110 = arith.mulf %30, %109 : vector<8x32xf32>
    %111 = arith.truncf %110 : vector<8x32xf32> to vector<8x32xbf16>
    %cst_24 = arith.constant dense<0.000000e+00> : vector<8x32xf32>
    %112 = tpu.matmul %108, %111, %cst_24 {dimension_numbers = #tpu.dot_dimension_numbers<[1], [0], [0], [1], [0, 0, 1, 1], [], []>} : vector<8x8xbf16>, vector<8x32xbf16>, vector<8x32xf32> -> vector<8x32xf32>
    %113 = arith.addf %86, %112 : vector<8x32xf32>
    %c24_i32_25 = arith.constant 24 : i32
    %114 = vector.broadcast %c24_i32_25 : i32 to vector<1x32xi32>
    %115 = arith.cmpi sge, %0, %114 : vector<1x32xi32>
    %c32_i32 = arith.constant 32 : i32
    %116 = vector.broadcast %c32_i32 : i32 to vector<1x32xi32>
    %117 = arith.cmpi slt, %0, %116 : vector<1x32xi32>
    %118 = arith.andi %115, %117 : vector<1x32xi1>
    %119 = arith.extui %118 : vector<1x32xi1> to vector<1x32xi32>
    %120 = arith.sitofp %119 : vector<1x32xi32> to vector<1x32xf32>
    %121 = vector.broadcast %120 : vector<1x32xf32> to vector<8x32xf32>
    %122 = arith.mulf %24, %121 : vector<8x32xf32>
    %123 = arith.truncf %122 : vector<8x32xf32> to vector<8x32xbf16>
    %cst_26 = arith.constant dense<0.000000e+00> : vector<8x8xf32>
    %124 = tpu.matmul %123, %31, %cst_26 {dimension_numbers = #tpu.dot_dimension_numbers<[1], [1], [0], [0], [0, 0, 1, 0], [], []>} : vector<8x32xbf16>, vector<8x32xbf16>, vector<8x8xf32> -> vector<8x8xf32>
    %cst_27 = arith.constant dense<0xFF800000> : vector<8xf32>
    %125 = vector.multi_reduction <maximumf>, %124, %cst_27 [1] : vector<8x8xf32> to vector<8xf32>
    %126 = vector.shape_cast %125 : vector<8xf32> to vector<8x1xf32>
    %127 = vector.broadcast %126 : vector<8x1xf32> to vector<8x8xf32>
    %128 = arith.subf %124, %127 : vector<8x8xf32>
    %129 = math.exp %128 : vector<8x8xf32>
    %cst_28 = arith.constant dense<0.000000e+00> : vector<8xf32>
    %130 = vector.multi_reduction <add>, %129, %cst_28 [1] : vector<8x8xf32> to vector<8xf32>
    %131 = vector.shape_cast %130 : vector<8xf32> to vector<8x1xf32>
    %132 = tpu.reciprocal %131 {approx = true} : vector<8x1xf32> -> vector<8x1xf32>
    %133 = vector.broadcast %132 : vector<8x1xf32> to vector<8x8xf32>
    %134 = arith.mulf %129, %133 : vector<8x8xf32>
    %135 = arith.truncf %134 : vector<8x8xf32> to vector<8x8xbf16>
    %136 = vector.broadcast %120 : vector<1x32xf32> to vector<8x32xf32>
    %137 = arith.mulf %30, %136 : vector<8x32xf32>
    %138 = arith.truncf %137 : vector<8x32xf32> to vector<8x32xbf16>
    %cst_29 = arith.constant dense<0.000000e+00> : vector<8x32xf32>
    %139 = tpu.matmul %135, %138, %cst_29 {dimension_numbers = #tpu.dot_dimension_numbers<[1], [0], [0], [1], [0, 0, 1, 1], [], []>} : vector<8x8xbf16>, vector<8x32xbf16>, vector<8x32xf32> -> vector<8x32xf32>
    %140 = arith.addf %113, %139 : vector<8x32xf32>
    %141 = arith.truncf %140 : vector<8x32xf32> to vector<8x32xbf16>
    %c0_30 = arith.constant 0 : index
    %c0_31 = arith.constant 0 : index
    %c0_32 = arith.constant 0 : index
    %142 = vector.load %arg7[%c0_30, %c0_31, %c0_32] : memref<1x32x32xbf16, #tpu.memory_space<vmem>>, vector<1x32x32xbf16>
    %143 = vector.shape_cast %142 : vector<1x32x32xbf16> to vector<32x32xbf16>
    %cst_33 = arith.constant dense<0.000000e+00> : vector<8x32xf32>
    %144 = tpu.matmul %141, %143, %cst_33 {dimension_numbers = #tpu.dot_dimension_numbers<[1], [0], [0], [1], [0, 0, 1, 1], [], []>} : vector<8x32xbf16>, vector<32x32xbf16>, vector<8x32xf32> -> vector<8x32xf32>
    %145 = vector.broadcast %10 : vector<1x32xf32> to vector<8x32xf32>
    %146 = arith.addf %144, %145 : vector<8x32xf32>
    %147 = arith.addf %4, %146 : vector<8x32xf32>
    %cst_34 = arith.constant dense<0.000000e+00> : vector<8xf32>
    %148 = vector.multi_reduction <add>, %147, %cst_34 [1] : vector<8x32xf32> to vector<8xf32>
    %149 = vector.shape_cast %148 : vector<8xf32> to vector<8x1xf32>
    %cst_35 = arith.constant 3.200000e+01 : f32
    %150 = vector.broadcast %cst_35 : f32 to vector<8x1xf32>
    %151 = arith.divf %149, %150 : vector<8x1xf32>
    %152 = vector.broadcast %151 : vector<8x1xf32> to vector<8x32xf32>
    %153 = arith.subf %147, %152 : vector<8x32xf32>
    %154 = arith.mulf %153, %153 : vector<8x32xf32>
    %cst_36 = arith.constant dense<0.000000e+00> : vector<8xf32>
    %155 = vector.multi_reduction <add>, %154, %cst_36 [1] : vector<8x32xf32> to vector<8xf32>
    %156 = vector.shape_cast %155 : vector<8xf32> to vector<8x1xf32>
    %cst_37 = arith.constant 3.200000e+01 : f32
    %157 = vector.broadcast %cst_37 : f32 to vector<8x1xf32>
    %158 = arith.divf %156, %157 : vector<8x1xf32>
    %159 = vector.broadcast %151 : vector<8x1xf32> to vector<8x32xf32>
    %160 = arith.subf %147, %159 : vector<8x32xf32>
    %cst_38 = arith.constant 9.99999974E-6 : f32
    %161 = vector.broadcast %cst_38 : f32 to vector<8x1xf32>
    %162 = arith.addf %158, %161 : vector<8x1xf32>
    %163 = math.rsqrt %162 : vector<8x1xf32>
    %164 = vector.broadcast %163 : vector<8x1xf32> to vector<8x32xf32>
    %165 = arith.mulf %160, %164 : vector<8x32xf32>
    %166 = vector.broadcast %12 : vector<1x32xf32> to vector<8x32xf32>
    %167 = arith.mulf %165, %166 : vector<8x32xf32>
    %168 = vector.broadcast %13 : vector<1x32xf32> to vector<8x32xf32>
    %169 = arith.addf %167, %168 : vector<8x32xf32>
    %170 = arith.truncf %169 : vector<8x32xf32> to vector<8x32xbf16>
    %c0_39 = arith.constant 0 : index
    %c0_40 = arith.constant 0 : index
    %c0_41 = arith.constant 0 : index
    %171 = vector.load %arg8[%c0_39, %c0_40, %c0_41] : memref<1x32x64xbf16, #tpu.memory_space<vmem>>, vector<1x32x64xbf16>
    %172 = vector.shape_cast %171 : vector<1x32x64xbf16> to vector<32x64xbf16>
    %cst_42 = arith.constant dense<0.000000e+00> : vector<8x64xf32>
    %173 = tpu.matmul %170, %172, %cst_42 {dimension_numbers = #tpu.dot_dimension_numbers<[1], [0], [0], [1], [0, 0, 1, 1], [], []>} : vector<8x32xbf16>, vector<32x64xbf16>, vector<8x64xf32> -> vector<8x64xf32>
    %c0_43 = arith.constant 0 : index
    %c0_44 = arith.constant 0 : index
    %c0_45 = arith.constant 0 : index
    %174 = vector.load %arg10[%c0_43, %c0_44, %c0_45] : memref<1x1x64xf32, #tpu.memory_space<vmem>>, vector<1x1x64xf32>
    %175 = vector.shape_cast %174 : vector<1x1x64xf32> to vector<1x64xf32>
    %176 = vector.broadcast %175 : vector<1x64xf32> to vector<8x64xf32>
    %177 = arith.addf %173, %176 : vector<8x64xf32>
    %cst_46 = arith.constant 0.000000e+00 : f32
    %178 = vector.broadcast %cst_46 : f32 to vector<8x64xf32>
    %179 = arith.maximumf %177, %178 : vector<8x64xf32>
    %180 = arith.truncf %179 : vector<8x64xf32> to vector<8x64xbf16>
    %c0_47 = arith.constant 0 : index
    %c0_48 = arith.constant 0 : index
    %c0_49 = arith.constant 0 : index
    %181 = vector.load %arg9[%c0_47, %c0_48, %c0_49] : memref<1x64x32xbf16, #tpu.memory_space<vmem>>, vector<1x64x32xbf16>
    %182 = vector.shape_cast %181 : vector<1x64x32xbf16> to vector<64x32xbf16>
    %cst_50 = arith.constant dense<0.000000e+00> : vector<8x32xf32>
    %183 = tpu.matmul %180, %182, %cst_50 {dimension_numbers = #tpu.dot_dimension_numbers<[1], [0], [0], [1], [0, 0, 1, 1], [], []>} : vector<8x64xbf16>, vector<64x32xbf16>, vector<8x32xf32> -> vector<8x32xf32>
    %184 = vector.broadcast %11 : vector<1x32xf32> to vector<8x32xf32>
    %185 = arith.addf %183, %184 : vector<8x32xf32>
    %186 = arith.addf %169, %185 : vector<8x32xf32>
    %cst_51 = arith.constant dense<0.000000e+00> : vector<8xf32>
    %187 = vector.multi_reduction <add>, %186, %cst_51 [1] : vector<8x32xf32> to vector<8xf32>
    %188 = vector.shape_cast %187 : vector<8xf32> to vector<8x1xf32>
    %cst_52 = arith.constant 3.200000e+01 : f32
    %189 = vector.broadcast %cst_52 : f32 to vector<8x1xf32>
    %190 = arith.divf %188, %189 : vector<8x1xf32>
    %191 = vector.broadcast %190 : vector<8x1xf32> to vector<8x32xf32>
    %192 = arith.subf %186, %191 : vector<8x32xf32>
    %193 = arith.mulf %192, %192 : vector<8x32xf32>
    %cst_53 = arith.constant dense<0.000000e+00> : vector<8xf32>
    %194 = vector.multi_reduction <add>, %193, %cst_53 [1] : vector<8x32xf32> to vector<8xf32>
    %195 = vector.shape_cast %194 : vector<8xf32> to vector<8x1xf32>
    %cst_54 = arith.constant 3.200000e+01 : f32
    %196 = vector.broadcast %cst_54 : f32 to vector<8x1xf32>
    %197 = arith.divf %195, %196 : vector<8x1xf32>
    %198 = vector.broadcast %190 : vector<8x1xf32> to vector<8x32xf32>
    %199 = arith.subf %186, %198 : vector<8x32xf32>
    %cst_55 = arith.constant 9.99999974E-6 : f32
    %200 = vector.broadcast %cst_55 : f32 to vector<8x1xf32>
    %201 = arith.addf %197, %200 : vector<8x1xf32>
    %202 = math.rsqrt %201 : vector<8x1xf32>
    %203 = vector.broadcast %202 : vector<8x1xf32> to vector<8x32xf32>
    %204 = arith.mulf %199, %203 : vector<8x32xf32>
    %205 = vector.broadcast %14 : vector<1x32xf32> to vector<8x32xf32>
    %206 = arith.mulf %204, %205 : vector<8x32xf32>
    %207 = vector.broadcast %15 : vector<1x32xf32> to vector<8x32xf32>
    %208 = arith.addf %206, %207 : vector<8x32xf32>
    %c0_56 = arith.constant 0 : index
    %c0_57 = arith.constant 0 : index
    %209 = vector.load %arg13[%c0_56, %c0_57] : memref<8x32xf32, #tpu.memory_space<vmem>>, vector<8x32xf32>
    tpu.vector_store %arg13[%c0_56, %c0_57], %208 {strides = array<i32>} : memref<8x32xf32, #tpu.memory_space<vmem>>, vector<8x32xf32>,
    %c1_i32 = arith.constant 1 : i32
    %210 = arith.cmpi eq, %arg1, %c1_i32 : i32
    %211 = arith.extui %210 : i1 to i32
    %c0_i32_58 = arith.constant 0 : i32
    %212 = arith.cmpi ne, %211, %c0_i32_58 : i32
    scf.if %212 {
      %c1 = arith.constant 1 : index
      %c0_59 = arith.constant 0 : index
      %213 = vector.load %arg5[%c1, %c0_59] : memref<3x32xf32, #tpu.memory_space<vmem>>, vector<1x32xf32>
      %c2 = arith.constant 2 : index
      %c0_60 = arith.constant 0 : index
      %214 = vector.load %arg5[%c2, %c0_60] : memref<3x32xf32, #tpu.memory_space<vmem>>, vector<1x32xf32>
      %cst_61 = arith.constant dense<0.000000e+00> : vector<8xf32>
      %215 = vector.multi_reduction <add>, %208, %cst_61 [1] : vector<8x32xf32> to vector<8xf32>
      %216 = vector.shape_cast %215 : vector<8xf32> to vector<8x1xf32>
      %cst_62 = arith.constant 3.200000e+01 : f32
      %217 = vector.broadcast %cst_62 : f32 to vector<8x1xf32>
      %218 = arith.divf %216, %217 : vector<8x1xf32>
      %219 = vector.broadcast %218 : vector<8x1xf32> to vector<8x32xf32>
      %220 = arith.subf %208, %219 : vector<8x32xf32>
      %221 = arith.mulf %220, %220 : vector<8x32xf32>
      %cst_63 = arith.constant dense<0.000000e+00> : vector<8xf32>
      %222 = vector.multi_reduction <add>, %221, %cst_63 [1] : vector<8x32xf32> to vector<8xf32>
      %223 = vector.shape_cast %222 : vector<8xf32> to vector<8x1xf32>
      %cst_64 = arith.constant 3.200000e+01 : f32
      %224 = vector.broadcast %cst_64 : f32 to vector<8x1xf32>
      %225 = arith.divf %223, %224 : vector<8x1xf32>
      %226 = vector.broadcast %218 : vector<8x1xf32> to vector<8x32xf32>
      %227 = arith.subf %208, %226 : vector<8x32xf32>
      %cst_65 = arith.constant 9.99999974E-6 : f32
      %228 = vector.broadcast %cst_65 : f32 to vector<8x1xf32>
      %229 = arith.addf %225, %228 : vector<8x1xf32>
      %230 = math.rsqrt %229 : vector<8x1xf32>
      %231 = vector.broadcast %230 : vector<8x1xf32> to vector<8x32xf32>
      %232 = arith.mulf %227, %231 : vector<8x32xf32>
      %233 = vector.broadcast %213 : vector<1x32xf32> to vector<8x32xf32>
      %234 = arith.mulf %232, %233 : vector<8x32xf32>
      %235 = vector.broadcast %214 : vector<1x32xf32> to vector<8x32xf32>
      %236 = arith.addf %234, %235 : vector<8x32xf32>
      %c0_66 = arith.constant 0 : index
      %c0_67 = arith.constant 0 : index
      %c0_68 = arith.constant 0 : index
      %237 = vector.load %arg12[%c0_66, %c0_67, %c0_68] : memref<1x8x32xf32, #tpu.memory_space<vmem>>, vector<1x8x32xf32>
      %238 = vector.shape_cast %237 : vector<1x8x32xf32> to vector<8x32xf32>
      %239 = vector.shape_cast %236 : vector<8x32xf32> to vector<1x8x32xf32>
      tpu.vector_store %arg12[%c0_66, %c0_67, %c0_68], %239 {strides = array<i32>} : memref<1x8x32xf32, #tpu.memory_space<vmem>>, vector<1x8x32xf32>,
    } else {
    }
    return
  }
  func.func @transform_0(%arg0: i32, %arg1: i32) -> (i32, i32, i32) {
    %c0_i32 = arith.constant 0 : i32
    %c0_i32_0 = arith.constant 0 : i32
    %c0_i32_1 = arith.constant 0 : i32
    return %arg0, %c0_i32, %c0_i32_0 : i32, i32, i32
  }
  func.func @transform_1(%arg0: i32, %arg1: i32) -> (i32, i32) {
    %c0_i32 = arith.constant 0 : i32
    %c0_i32_0 = arith.constant 0 : i32
    %c0_i32_1 = arith.constant 0 : i32
    return %c0_i32, %c0_i32_0 : i32, i32
  }
  func.func @transform_2(%arg0: i32, %arg1: i32) -> (i32, i32) {
    %c0_i32 = arith.constant 0 : i32
    %c0_i32_0 = arith.constant 0 : i32
    %c0_i32_1 = arith.constant 0 : i32
    return %c0_i32, %c0_i32_0 : i32, i32
  }
  func.func @transform_3(%arg0: i32, %arg1: i32) -> (i32, i32) {
    %c0_i32 = arith.constant 0 : i32
    %c0_i32_0 = arith.constant 0 : i32
    %c0_i32_1 = arith.constant 0 : i32
    return %c0_i32, %c0_i32_0 : i32, i32
  }
  func.func @transform_4(%arg0: i32, %arg1: i32) -> (i32, i32, i32) {
    %c0_i32 = arith.constant 0 : i32
    %c0_i32_0 = arith.constant 0 : i32
    %c0_i32_1 = arith.constant 0 : i32
    return %arg1, %c0_i32, %c0_i32_0 : i32, i32, i32
  }
  func.func @transform_5(%arg0: i32, %arg1: i32) -> (i32, i32, i32) {
    %c0_i32 = arith.constant 0 : i32
    %c0_i32_0 = arith.constant 0 : i32
    %c0_i32_1 = arith.constant 0 : i32
    return %arg1, %c0_i32, %c0_i32_0 : i32, i32, i32
  }
  func.func @transform_6(%arg0: i32, %arg1: i32) -> (i32, i32, i32) {
    %c0_i32 = arith.constant 0 : i32
    %c0_i32_0 = arith.constant 0 : i32
    %c0_i32_1 = arith.constant 0 : i32
    return %arg1, %c0_i32, %c0_i32_0 : i32, i32, i32
  }
  func.func @transform_7(%arg0: i32, %arg1: i32) -> (i32, i32, i32) {
    %c0_i32 = arith.constant 0 : i32
    %c0_i32_0 = arith.constant 0 : i32
    %c0_i32_1 = arith.constant 0 : i32
    return %arg1, %c0_i32, %c0_i32_0 : i32, i32, i32
  }
  func.func @transform_8(%arg0: i32, %arg1: i32) -> (i32, i32, i32) {
    %c0_i32 = arith.constant 0 : i32
    %c0_i32_0 = arith.constant 0 : i32
    %c0_i32_1 = arith.constant 0 : i32
    return %arg1, %c0_i32, %c0_i32_0 : i32, i32, i32
  }
  func.func @transform_9(%arg0: i32, %arg1: i32) -> (i32, i32, i32) {
    %c0_i32 = arith.constant 0 : i32
    %c0_i32_0 = arith.constant 0 : i32
    %c0_i32_1 = arith.constant 0 : i32
    return %arg1, %c0_i32, %c0_i32_0 : i32, i32, i32
  }
  func.func @transform_10(%arg0: i32, %arg1: i32) -> (i32, i32, i32) {
    %c0_i32 = arith.constant 0 : i32
    %c0_i32_0 = arith.constant 0 : i32
    %c0_i32_1 = arith.constant 0 : i32
    return %arg0, %c0_i32, %c0_i32_0 : i32, i32, i32
  }
}

</mosaic_0001>

<llo_original>
// kernel: transformer_encoder_forward.1
$region0: #{transformer_encoder_forward.1}
  #allocation0 [shape = 'u32[]', space=smem, size = 0x4, offset = 0x4, fixed_abs, tag = 'smem constant byte address 0x4 - core index']
  #allocation1 [shape = 'u32[144,128]{1,0:T(1,128)}', space=vmem, size = 0x12000, scoped, tag = 'internal scratch']
  #allocation2 [shape = 'f32[8,32]{1,0:T(8,128)}', space=vmem, size = 0x1000, scoped, tag = 'scratch operand']
  %s0 = inlined_call_operand.vmem [shape: f32[2,8,16], index: 0, kind: input, shape index: {}]
  %s1 = inlined_call_operand.vmem [shape: f32[8,32], index: 1, kind: input, shape index: {}]
  %s2 = inlined_call_operand.vmem [shape: bf16[16,32], index: 2, kind: input, shape index: {}]
  %s3 = inlined_call_operand.vmem [shape: f32[3,32], index: 3, kind: input, shape index: {}]
  %s4 = inlined_call_operand.vmem [shape: bf16[2,32,96], index: 4, kind: input, shape index: {}]
  %s5 = inlined_call_operand.vmem [shape: bf16[2,32,32], index: 5, kind: input, shape index: {}]
  %s6 = inlined_call_operand.vmem [shape: bf16[2,32,64], index: 6, kind: input, shape index: {}]
  %s7 = inlined_call_operand.vmem [shape: bf16[2,64,32], index: 7, kind: input, shape index: {}]
  %s8 = inlined_call_operand.vmem [shape: f32[2,1,64], index: 8, kind: input, shape index: {}]
  %s9 = inlined_call_operand.vmem [shape: f32[2,9,32], index: 9, kind: input, shape index: {}]
  %s10 = inlined_call_operand.vmem [shape: f32[2,8,32], index: 10, kind: output, shape index: {}]
  %s11 = sld [smem:[#allocation0]]
  $region81: #{transformer_encoder_forward.1} parent=0
    _
  %s13 = ssub.s32 1, %s11
  %s14 = scalar_select 0, %s13, %s11
  loop: start=0, step=1, limit=6
  $region2: #{transformer_encoder_forward.1} parent=0 // loop_pre_header
    _
  $region3: #{transformer_encoder_forward.1} parent=0 // loop_header
    %s16 = sphi 0, %s20
    %p17 = scmp.ge.s32.totalorder %s16, 6
    %s23 = sphi 0, %s35
    %s24 = sphi 0, %s31
    %s25 = sphi 0, %s23
    %s26 = sphi 0, %s24
    %s27 = sphi 0, %s25
    %s28 = sphi 0, %s26
    %s38 = sphi 0, %s40
    %s41 = sphi 0, %s38
    %s42 = sphi 0, %s41
    %s58 = sphi 0, %s42
    %s62 = sphi 0, %s62
    %s64 = sphi 0, %s62
    %s65 = sphi 0, %s64
    %s79 = sphi 0, %s65
    %s83 = sphi 0, %s83
    %s85 = sphi 0, %s83
    %s86 = sphi 0, %s85
    %s100 = sphi 0, %s86
    %s104 = sphi 0, %s104
    %s106 = sphi 0, %s104
    %s107 = sphi 0, %s106
    %s121 = sphi 0, %s107
    %s127 = sphi 0, %s129
    %s130 = sphi 0, %s127
    %s131 = sphi 0, %s130
    %s147 = sphi 0, %s131
    %s153 = sphi 0, %s155
    %s156 = sphi 0, %s153
    %s157 = sphi 0, %s156
    %s173 = sphi 0, %s157
    %s179 = sphi 0, %s181
    %s182 = sphi 0, %s179
    %s183 = sphi 0, %s182
    %s199 = sphi 0, %s183
    %s205 = sphi 0, %s207
    %s208 = sphi 0, %s205
    %s209 = sphi 0, %s208
    %s225 = sphi 0, %s209
    %s231 = sphi 0, %s233
    %s234 = sphi 0, %s231
    %s235 = sphi 0, %s234
    %s251 = sphi 0, %s235
    %s257 = sphi 0, %s259
    %s260 = sphi 0, %s257
    %s261 = sphi 0, %s260
    %s277 = sphi 0, %s261
    %s283 = sphi 0, %s285
    %s286 = sphi 0, %s283
    %s287 = sphi 0, %s286
    %s303 = sphi 0, %s287
  $region4: #{transformer_encoder_forward.1} parent=0 // loop_header_branch
    %19 = sbr.rel (%p17) target = $region8
  $region5: #{transformer_encoder_forward.1} parent=0 // loop_body
    %s21 = ssub.s32 %s16, 1
    %s22 = ssub.s32 %s16, 2
    %s29 = sadd.s32 1, %s24
    %p30 = scmp.ge.s32.totalorder %s29, 2
    %s31 = scalar_select %p30, 0, %s29
    %s32 = sadd.s32 1, %s23
    %s33 = scalar_select %p30, %s32, %s23
    %p34 = scmp.ge.s32.totalorder %s33, 2
    %s35 = scalar_select %p34, 0, %s33
    %s36 = ssub.s32 %s23, %s35
    %p37 = scmp.eq.s32.totalorder %s36, 0
    %s39 = sadd.s32 %s38, 1
    %s40 = scalar_select %p37, %s38, %s39
    %p43 = pneg %p37
    %p44 = scmp.eq.s32.totalorder %s16, 3
    %p45 = por %p43, %p44
    %p46 = scmp.ne.s32.totalorder %s38, %s41
    %p47 = scmp.eq.s32.totalorder %s16, 0
    %p48 = por %p46, %p47
    %p49 = scmp.ne.s32.totalorder %s38, %s41
    %p50 = scmp.eq.s32.totalorder %s21, 3
    %p51 = por %p49, %p50
    %p52 = scmp.ne.s32.totalorder %s41, %s42
    %p53 = scmp.eq.s32.totalorder %s21, 0
    %p54 = por %p52, %p53
    %p55 = scmp.ne.s32.totalorder %s41, %s42
    %p56 = scmp.eq.s32.totalorder %s22, 3
    %p57 = por %p55, %p56
    %p59 = scmp.ne.s32.totalorder %s42, %s58
    %p60 = scmp.eq.s32.totalorder %s22, 0
    %p61 = por %p59, %p60
    %s63 = sadd.s32 %s62, 1
    %p66 = scmp.eq.s32.totalorder %s16, 3
    %p67 = scmp.ne.s32.totalorder %s62, %s64
    %p68 = scmp.eq.s32.totalorder %s16, 0
    %p69 = por %p67, %p68
    %p70 = scmp.ne.s32.totalorder %s62, %s64
    %p71 = scmp.eq.s32.totalorder %s21, 3
    %p72 = por %p70, %p71
    %p73 = scmp.ne.s32.totalorder %s64, %s65
    %p74 = scmp.eq.s32.totalorder %s21, 0
    %p75 = por %p73, %p74
    %p76 = scmp.ne.s32.totalorder %s64, %s65
    %p77 = scmp.eq.s32.totalorder %s22, 3
    %p78 = por %p76, %p77
    %p80 = scmp.ne.s32.totalorder %s65, %s79
    %p81 = scmp.eq.s32.totalorder %s22, 0
    %p82 = por %p80, %p81
    %s84 = sadd.s32 %s83, 1
    %p87 = scmp.eq.s32.totalorder %s16, 3
    %p88 = scmp.ne.s32.totalorder %s83, %s85
    %p89 = scmp.eq.s32.totalorder %s16, 0
    %p90 = por %p88, %p89
    %p91 = scmp.ne.s32.totalorder %s83, %s85
    %p92 = scmp.eq.s32.totalorder %s21, 3
    %p93 = por %p91, %p92
    %p94 = scmp.ne.s32.totalorder %s85, %s86
    %p95 = scmp.eq.s32.totalorder %s21, 0
    %p96 = por %p94, %p95
    %p97 = scmp.ne.s32.totalorder %s85, %s86
    %p98 = scmp.eq.s32.totalorder %s22, 3
    %p99 = por %p97, %p98
    %p101 = scmp.ne.s32.totalorder %s86, %s100
    %p102 = scmp.eq.s32.totalorder %s22, 0
    %p103 = por %p101, %p102
    %s105 = sadd.s32 %s104, 1
    %p108 = scmp.eq.s32.totalorder %s16, 3
    %p109 = scmp.ne.s32.totalorder %s104, %s106
    %p110 = scmp.eq.s32.totalorder %s16, 0
    %p111 = por %p109, %p110
    %p112 = scmp.ne.s32.totalorder %s104, %s106
    %p113 = scmp.eq.s32.totalorder %s21, 3
    %p114 = por %p112, %p113
    %p115 = scmp.ne.s32.totalorder %s106, %s107
    %p116 = scmp.eq.s32.totalorder %s21, 0
    %p117 = por %p115, %p116
    %p118 = scmp.ne.s32.totalorder %s106, %s107
    %p119 = scmp.eq.s32.totalorder %s22, 3
    %p120 = por %p118, %p119
    %p122 = scmp.ne.s32.totalorder %s107, %s121
    %p123 = scmp.eq.s32.totalorder %s22, 0
    %p124 = por %p122, %p123
    %s125 = ssub.s32 %s24, %s31
    %p126 = scmp.eq.s32.totalorder %s125, 0
    %s128 = sadd.s32 %s127, 1
    %s129 = scalar_select %p126, %s127, %s128
    %p132 = pneg %p126
    %p133 = scmp.eq.s32.totalorder %s16, 3
    %p134 = por %p132, %p133
    %p135 = scmp.ne.s32.totalorder %s127, %s130
    %p136 = scmp.eq.s32.totalorder %s16, 0
    %p137 = por %p135, %p136
    %p138 = scmp.ne.s32.totalorder %s127, %s130
    %p139 = scmp.eq.s32.totalorder %s21, 3
    %p140 = por %p138, %p139
    %p141 = scmp.ne.s32.totalorder %s130, %s131
    %p142 = scmp.eq.s32.totalorder %s21, 0
    %p143 = por %p141, %p142
    %p144 = scmp.ne.s32.totalorder %s130, %s131
    %p145 = scmp.eq.s32.totalorder %s22, 3
    %p146 = por %p144, %p145
    %p148 = scmp.ne.s32.totalorder %s131, %s147
    %p149 = scmp.eq.s32.totalorder %s22, 0
    %p150 = por %p148, %p149
    %s151 = ssub.s32 %s24, %s31
    %p152 = scmp.eq.s32.totalorder %s151, 0
    %s154 = sadd.s32 %s153, 1
    %s155 = scalar_select %p152, %s153, %s154
    %p158 = pneg %p152
    %p159 = scmp.eq.s32.totalorder %s16, 3
    %p160 = por %p158, %p159
    %p161 = scmp.ne.s32.totalorder %s153, %s156
    %p162 = scmp.eq.s32.totalorder %s16, 0
    %p163 = por %p161, %p162
    %p164 = scmp.ne.s32.totalorder %s153, %s156
    %p165 = scmp.eq.s32.totalorder %s21, 3
    %p166 = por %p164, %p165
    %p167 = scmp.ne.s32.totalorder %s156, %s157
    %p168 = scmp.eq.s32.totalorder %s21, 0
    %p169 = por %p167, %p168
    %p170 = scmp.ne.s32.totalorder %s156, %s157
    %p171 = scmp.eq.s32.totalorder %s22, 3
    %p172 = por %p170, %p171
    %p174 = scmp.ne.s32.totalorder %s157, %s173
    %p175 = scmp.eq.s32.totalorder %s22, 0
    %p176 = por %p174, %p175
    %s177 = ssub.s32 %s24, %s31
    %p178 = scmp.eq.s32.totalorder %s177, 0
    %s180 = sadd.s32 %s179, 1
    %s181 = scalar_select %p178, %s179, %s180
    %p184 = pneg %p178
    %p185 = scmp.eq.s32.totalorder %s16, 3
    %p186 = por %p184, %p185
    %p187 = scmp.ne.s32.totalorder %s179, %s182
    %p188 = scmp.eq.s32.totalorder %s16, 0
    %p189 = por %p187, %p188
    %p190 = scmp.ne.s32.totalorder %s179, %s182
    %p191 = scmp.eq.s32.totalorder %s21, 3
    %p192 = por %p190, %p191
    %p193 = scmp.ne.s32.totalorder %s182, %s183
    %p194 = scmp.eq.s32.totalorder %s21, 0
    %p195 = por %p193, %p194
    %p196 = scmp.ne.s32.totalorder %s182, %s183
    %p197 = scmp.eq.s32.totalorder %s22, 3
    %p198 = por %p196, %p197
    %p200 = scmp.ne.s32.totalorder %s183, %s199
    %p201 = scmp.eq.s32.totalorder %s22, 0
    %p202 = por %p200, %p201
    %s203 = ssub.s32 %s24, %s31
    %p204 = scmp.eq.s32.totalorder %s203, 0
    %s206 = sadd.s32 %s205, 1
    %s207 = scalar_select %p204, %s205, %s206
    %p210 = pneg %p204
    %p211 = scmp.eq.s32.totalorder %s16, 3
    %p212 = por %p210, %p211
    %p213 = scmp.ne.s32.totalorder %s205, %s208
    %p214 = scmp.eq.s32.totalorder %s16, 0
    %p215 = por %p213, %p214
    %p216 = scmp.ne.s32.totalorder %s205, %s208
    %p217 = scmp.eq.s32.totalorder %s21, 3
    %p218 = por %p216, %p217
    %p219 = scmp.ne.s32.totalorder %s208, %s209
    %p220 = scmp.eq.s32.totalorder %s21, 0
    %p221 = por %p219, %p220
    %p222 = scmp.ne.s32.totalorder %s208, %s209
    %p223 = scmp.eq.s32.totalorder %s22, 3
    %p224 = por %p222, %p223
    %p226 = scmp.ne.s32.totalorder %s209, %s225
    %p227 = scmp.eq.s32.totalorder %s22, 0
    %p228 = por %p226, %p227
    %s229 = ssub.s32 %s24, %s31
    %p230 = scmp.eq.s32.totalorder %s229, 0
    %s232 = sadd.s32 %s231, 1
    %s233 = scalar_select %p230, %s231, %s232
    %p236 = pneg %p230
    %p237 = scmp.eq.s32.totalorder %s16, 3
    %p238 = por %p236, %p237
    %p239 = scmp.ne.s32.totalorder %s231, %s234
    %p240 = scmp.eq.s32.totalorder %s16, 0
    %p241 = por %p239, %p240
    %p242 = scmp.ne.s32.totalorder %s231, %s234
    %p243 = scmp.eq.s32.totalorder %s21, 3
    %p244 = por %p242, %p243
    %p245 = scmp.ne.s32.totalorder %s234, %s235
    %p246 = scmp.eq.s32.totalorder %s21, 0
    %p247 = por %p245, %p246
    %p248 = scmp.ne.s32.totalorder %s234, %s235
    %p249 = scmp.eq.s32.totalorder %s22, 3
    %p250 = por %p248, %p249
    %p252 = scmp.ne.s32.totalorder %s235, %s251
    %p253 = scmp.eq.s32.totalorder %s22, 0
    %p254 = por %p252, %p253
    %s255 = ssub.s32 %s24, %s31
    %p256 = scmp.eq.s32.totalorder %s255, 0
    %s258 = sadd.s32 %s257, 1
    %s259 = scalar_select %p256, %s257, %s258
    %p262 = pneg %p256
    %p263 = scmp.eq.s32.totalorder %s16, 3
    %p264 = por %p262, %p263
    %p265 = scmp.ne.s32.totalorder %s257, %s260
    %p266 = scmp.eq.s32.totalorder %s16, 0
    %p267 = por %p265, %p266
    %p268 = scmp.ne.s32.totalorder %s257, %s260
    %p269 = scmp.eq.s32.totalorder %s21, 3
    %p270 = por %p268, %p269
    %p271 = scmp.ne.s32.totalorder %s260, %s261
    %p272 = scmp.eq.s32.totalorder %s21, 0
    %p273 = por %p271, %p272
    %p274 = scmp.ne.s32.totalorder %s260, %s261
    %p275 = scmp.eq.s32.totalorder %s22, 3
    %p276 = por %p274, %p275
    %p278 = scmp.ne.s32.totalorder %s261, %s277
    %p279 = scmp.eq.s32.totalorder %s22, 0
    %p280 = por %p278, %p279
    %s281 = ssub.s32 %s23, %s35
    %p282 = scmp.eq.s32.totalorder %s281, 0
    %s284 = sadd.s32 %s283, 1
    %s285 = scalar_select %p282, %s283, %s284
    %p288 = pneg %p282
    %p289 = scmp.eq.s32.totalorder %s16, 3
    %p290 = por %p288, %p289
    %p291 = scmp.ne.s32.totalorder %s283, %s286
    %p292 = scmp.eq.s32.totalorder %s16, 0
    %p293 = por %p291, %p292
    %p294 = scmp.ne.s32.totalorder %s283, %s286
    %p295 = scmp.eq.s32.totalorder %s21, 3
    %p296 = por %p294, %p295
    %p297 = scmp.ne.s32.totalorder %s286, %s287
    %p298 = scmp.eq.s32.totalorder %s21, 0
    %p299 = por %p297, %p298
    %p300 = scmp.ne.s32.totalorder %s286, %s287
    %p301 = scmp.eq.s32.totalorder %s22, 3
    %p302 = por %p300, %p301
    %p304 = scmp.ne.s32.totalorder %s287, %s303
    %p305 = scmp.eq.s32.totalorder %s22, 0
    %p306 = por %p304, %p305
    %p307 = scmp.le.s32.totalorder 1, %s16
    %p308 = scmp.lt.s32.totalorder %s16, 5
    %p309 = pnand %p307, %p308
    %p310 = pneg %p309
    // Predicated region
    $region9: #{transformer_encoder_forward.1} parent=5 // pred_check
      _
    $region10: #{transformer_encoder_forward.1} parent=5 // pred_check_branch
      %312 = sbr.rel (%p309) target = $region12
    $region11: #{transformer_encoder_forward.1} parent=5 // pred_region
      %s313 = ssub.s32 %s16, 1
      // Predicated region
      $region13: #{transformer_encoder_forward.1} parent=11 // pred_check
        %p314 = pneg %p75
      $region14: #{transformer_encoder_forward.1} parent=11 // pred_check_branch
        %316 = sbr.rel (%p314) target = $region16
      $region15: #{transformer_encoder_forward.1} parent=11 // pred_region
        _
      $region16: #{transformer_encoder_forward.1} parent=11 // pred_fallthru
        _
      // Predicated region
      $region17: #{transformer_encoder_forward.1} parent=11 // pred_check
        %p317 = pneg %p96
      $region18: #{transformer_encoder_forward.1} parent=11 // pred_check_branch
        %319 = sbr.rel (%p317) target = $region20
      $region19: #{transformer_encoder_forward.1} parent=11 // pred_region
        _
      $region20: #{transformer_encoder_forward.1} parent=11 // pred_fallthru
        _
      // Predicated region
      $region21: #{transformer_encoder_forward.1} parent=11 // pred_check
        %p320 = pneg %p117
      $region22: #{transformer_encoder_forward.1} parent=11 // pred_check_branch
        %322 = sbr.rel (%p320) target = $region24
      $region23: #{transformer_encoder_forward.1} parent=11 // pred_region
        _
      $region24: #{transformer_encoder_forward.1} parent=11 // pred_fallthru
        _
    $region12: #{transformer_encoder_forward.1} parent=5 // pred_fallthru
      _
    %p323 = scmp.lt.s32.totalorder %s16, 4
    // Predicated region
    $region25: #{transformer_encoder_forward.1} parent=5 // pred_check
      %p324 = pneg %p323
    $region26: #{transformer_encoder_forward.1} parent=5 // pred_check_branch
      %326 = sbr.rel (%p324) target = $region28
    $region27: #{transformer_encoder_forward.1} parent=5 // pred_region
      // Predicated region
      $region29: #{transformer_encoder_forward.1} parent=27 // pred_check
        %p327 = pneg %p48
      $region30: #{transformer_encoder_forward.1} parent=27 // pred_check_branch
        %329 = sbr.rel (%p327) target = $region32
      $region31: #{transformer_encoder_forward.1} parent=27 // pred_region
        %p330 = scmp.lt.s32.totalorder %s23, 1
        %s331 = scalar_select %p330, %s23, 1
        %s332 = smul.addr %s331, 8
        %s333 = scalar_lea.vmem %s0, %s332
      $region32: #{transformer_encoder_forward.1} parent=27 // pred_fallthru
        _
      // Predicated region
      $region33: #{transformer_encoder_forward.1} parent=27 // pred_check
        %p334 = pneg %p137
      $region34: #{transformer_encoder_forward.1} parent=27 // pred_check_branch
        %336 = sbr.rel (%p334) target = $region36
      $region35: #{transformer_encoder_forward.1} parent=27 // pred_region
        %p337 = scmp.lt.s32.totalorder %s24, 1
        %s338 = scalar_select %p337, %s24, 1
        %s339 = smul.addr %s338, 4
        %s340 = smul.addr %s339, 4
        %s341 = scalar_lea.vmem %s4, %s340
      $region36: #{transformer_encoder_forward.1} parent=27 // pred_fallthru
        _
      // Predicated region
      $region37: #{transformer_encoder_forward.1} parent=27 // pred_check
        %p342 = pneg %p163
      $region38: #{transformer_encoder_forward.1} parent=27 // pred_check_branch
        %344 = sbr.rel (%p342) target = $region40
      $region39: #{transformer_encoder_forward.1} parent=27 // pred_region
        %p345 = scmp.lt.s32.totalorder %s24, 1
        %s346 = scalar_select %p345, %s24, 1
        %s347 = smul.addr %s346, 4
        %s348 = smul.addr %s347, 4
        %s349 = scalar_lea.vmem %s5, %s348
      $region40: #{transformer_encoder_forward.1} parent=27 // pred_fallthru
        _
      // Predicated region
      $region41: #{transformer_encoder_forward.1} parent=27 // pred_check
        %p350 = pneg %p189
      $region42: #{transformer_encoder_forward.1} parent=27 // pred_check_branch
        %352 = sbr.rel (%p350) target = $region44
      $region43: #{transformer_encoder_forward.1} parent=27 // pred_region
        %p353 = scmp.lt.s32.totalorder %s24, 1
        %s354 = scalar_select %p353, %s24, 1
        %s355 = smul.addr %s354, 4
        %s356 = smul.addr %s355, 4
        %s357 = scalar_lea.vmem %s6, %s356
      $region44: #{transformer_encoder_forward.1} parent=27 // pred_fallthru
        _
      // Predicated region
      $region45: #{transformer_encoder_forward.1} parent=27 // pred_check
        %p358 = pneg %p215
      $region46: #{transformer_encoder_forward.1} parent=27 // pred_check_branch
        %360 = sbr.rel (%p358) target = $region48
      $region47: #{transformer_encoder_forward.1} parent=27 // pred_region
        %p361 = scmp.lt.s32.totalorder %s24, 1
        %s362 = scalar_select %p361, %s24, 1
        %s363 = smul.addr %s362, 8
        %s364 = smul.addr %s363, 4
        %s365 = scalar_lea.vmem %s7, %s364
      $region48: #{transformer_encoder_forward.1} parent=27 // pred_fallthru
        _
      // Predicated region
      $region49: #{transformer_encoder_forward.1} parent=27 // pred_check
        %p366 = pneg %p241
      $region50: #{transformer_encoder_forward.1} parent=27 // pred_check_branch
        %368 = sbr.rel (%p366) target = $region52
      $region51: #{transformer_encoder_forward.1} parent=27 // pred_region
        %p369 = scmp.lt.s32.totalorder %s24, 1
        %s370 = scalar_select %p369, %s24, 1
        %s371 = scalar_lea.vmem %s8, %s370
      $region52: #{transformer_encoder_forward.1} parent=27 // pred_fallthru
        _
      // Predicated region
      $region53: #{transformer_encoder_forward.1} parent=27 // pred_check
        %p372 = pneg %p267
      $region54: #{transformer_encoder_forward.1} parent=27 // pred_check_branch
        %374 = sbr.rel (%p372) target = $region56
      $region55: #{transformer_encoder_forward.1} parent=27 // pred_region
        %p375 = scmp.lt.s32.totalorder %s24, 1
        %s376 = scalar_select %p375, %s24, 1
        %s377 = smul.addr %s376, 2
        %s378 = smul.addr %s377, 8
        %s379 = scalar_lea.vmem %s9, %s378
      $region56: #{transformer_encoder_forward.1} parent=27 // pred_fallthru
        _
    $region28: #{transformer_encoder_forward.1} parent=5 // pred_fallthru
      _
    %p380 = scmp.le.s32.totalorder 1, %s16
    %p381 = scmp.lt.s32.totalorder %s16, 5
    %p382 = pnand %p380, %p381
    %p383 = pneg %p382
    // Predicated region
    $region57: #{transformer_encoder_forward.1} parent=5 // pred_check
      _
    $region58: #{transformer_encoder_forward.1} parent=5 // pred_check_branch
      %385 = sbr.rel (%p382) target = $region60
    $region59: #{transformer_encoder_forward.1} parent=5 // pred_region
      %s386 = ssub.s32 %s16, 1
      %p387 = scmp.lt.s32.totalorder %s25, 1
      %s388 = scalar_select %p387, %s25, 1
      %s389 = smul.addr %s388, 8
      %s390 = scalar_lea.vmem %s0, %s389
      %p391 = pneg %p54
      %p392 = pneg %p51
      %p393 = pneg %p75
      %p394 = pneg %p72
      %p395 = pneg %p96
      %p396 = pneg %p93
      %p397 = pneg %p117
      %p398 = pneg %p114
      %p399 = scmp.lt.s32.totalorder %s26, 1
      %s400 = scalar_select %p399, %s26, 1
      %s401 = smul.addr %s400, 4
      %s402 = smul.addr %s401, 4
      %s403 = scalar_lea.vmem %s4, %s402
      %p404 = pneg %p143
      %p405 = pneg %p140
      %p406 = scmp.lt.s32.totalorder %s26, 1
      %s407 = scalar_select %p406, %s26, 1
      %s408 = smul.addr %s407, 4
      %s409 = smul.addr %s408, 4
      %s410 = scalar_lea.vmem %s5, %s409
      %p411 = pneg %p169
      %p412 = pneg %p166
      %p413 = scmp.lt.s32.totalorder %s26, 1
      %s414 = scalar_select %p413, %s26, 1
      %s415 = smul.addr %s414, 4
      %s416 = smul.addr %s415, 4
      %s417 = scalar_lea.vmem %s6, %s416
      %p418 = pneg %p195
      %p419 = pneg %p192
      %p420 = scmp.lt.s32.totalorder %s26, 1
      %s421 = scalar_select %p420, %s26, 1
      %s422 = smul.addr %s421, 8
      %s423 = smul.addr %s422, 4
      %s424 = scalar_lea.vmem %s7, %s423
      %p425 = pneg %p221
      %p426 = pneg %p218
      %p427 = scmp.lt.s32.totalorder %s26, 1
      %s428 = scalar_select %p427, %s26, 1
      %s429 = scalar_lea.vmem %s8, %s428
      %p430 = pneg %p247
      %p431 = pneg %p244
      %p432 = scmp.lt.s32.totalorder %s26, 1
      %s433 = scalar_select %p432, %s26, 1
      %s434 = smul.addr %s433, 2
      %s435 = smul.addr %s434, 8
      %s436 = scalar_lea.vmem %s9, %s435
      %p437 = pneg %p273
      %p438 = pneg %p270
      %p439 = pneg %p299
      %p440 = pneg %p296
      %p441 = scmp.lt.s32.totalorder %s25, 1
      %s442 = scalar_select %p441, %s25, 1
      %s443 = smul.addr %s442, 8
      %s444 = scalar_lea.vmem %s10, %s443
      %p445 = scmp.lt.s32.totalorder %s25, 1
      %s446 = scalar_select %p445, %s25, 1
      %s447 = smul.addr %s446, 8
      %s448 = scalar_lea.vmem %s0, %s447
      %p449 = scmp.lt.s32.totalorder %s26, 1
      %s450 = scalar_select %p449, %s26, 1
      %s451 = smul.addr %s450, 4
      %s452 = smul.addr %s451, 4
      %s453 = scalar_lea.vmem %s4, %s452
      %p454 = scmp.lt.s32.totalorder %s26, 1
      %s455 = scalar_select %p454, %s26, 1
      %s456 = smul.addr %s455, 4
      %s457 = smul.addr %s456, 4
      %s458 = scalar_lea.vmem %s5, %s457
      %p459 = scmp.lt.s32.totalorder %s26, 1
      %s460 = scalar_select %p459, %s26, 1
      %s461 = smul.addr %s460, 4
      %s462 = smul.addr %s461, 4
      %s463 = scalar_lea.vmem %s6, %s462
      %p464 = scmp.lt.s32.totalorder %s26, 1
      %s465 = scalar_select %p464, %s26, 1
      %s466 = smul.addr %s465, 8
      %s467 = smul.addr %s466, 4
      %s468 = scalar_lea.vmem %s7, %s467
      %p469 = scmp.lt.s32.totalorder %s26, 1
      %s470 = scalar_select %p469, %s26, 1
      %s471 = scalar_lea.vmem %s8, %s470
      %p472 = scmp.lt.s32.totalorder %s26, 1
      %s473 = scalar_select %p472, %s26, 1
      %s474 = smul.addr %s473, 2
      %s475 = smul.addr %s474, 8
      %s476 = scalar_lea.vmem %s9, %s475
      %p477 = scmp.lt.s32.totalorder %s25, 1
      %s478 = scalar_select %p477, %s25, 1
      %s479 = smul.addr %s478, 8
      %s480 = scalar_lea.vmem %s10, %s479
      %v482 = vlaneseq
      %v483 = vand.u32 %v482, 127
      %p484 = scmp.eq.s32.totalorder %s26, 0
      // Predicated region
      $region61: #{transformer_encoder_forward.1} parent=59 // pred_check
        %p485 = pneg %p484
      $region62: #{transformer_encoder_forward.1} parent=59 // pred_check_branch
        %487 = sbr.rel (%p485) target = $region64
      $region63: #{transformer_encoder_forward.1} parent=59 // pred_region
        %v488 = vld [vmem:[%s3] sm:$0x1]
        %v489 = vld [vmem:[%s448] sm:$0xff]
        %v490 = vpack.c.bf16 %v489, %v489
        %v491 = vld [vmem:[%s2] sm:$0xf]
        %v492 = vld [vmem:[%s2 + $0x4] sm:$0xf]
        %v493 = vlaneseq
        %v494 = vshrl.u32 %v493, 7
        %v495 = vsub.s32 0, %v494
        %v496 = vrot.slane %v488, %v495
        %v499 = vunpack.c.l.b16 %v491
        %v500 = vunpack.c.l.b16 %v492
        %v501 = vpack.c.b16 %v500, %v499
        %vm503 = vcmask 130048
        %v505 = vsel %vm503, %v490, 0
        %507 = vmatprep.subr.bf16.mxu0 0
        %508 = vmatpush1.bf16.msra.mxu0 %v501
        %509 = vmatprep.subr.bf16.mxu0 0
        %510 = vmatpush1.bf16.msra.mxu0 0
        %511 = vmatprep.subr.bf16.mxu0 0
        %512 = vmatpush1.bf16.msra.mxu0 0
        %513 = vmatprep.subr.bf16.mxu0 0
        %514 = vmatpush1.bf16.msra.mxu0 0
        %515 = vmatprep.subr.bf16.mxu0 0
        %516 = vmatpush1.bf16.msra.mxu0 0
        %517 = vmatprep.subr.bf16.mxu0 0
        %518 = vmatpush1.bf16.msra.mxu0 0
        %519 = vmatprep.subr.bf16.mxu0 0
        %520 = vmatpush1.bf16.msra.mxu0 0
        %521 = vmatprep.subr.bf16.mxu0 0
        %522 = vmatpush1.bf16.msra.mxu0 0
        %523 = vmatprep.subr.bf16.mxu0 0
        %524 = vmatpush1.bf16.msra.mxu0 0
        %525 = vmatprep.subr.bf16.mxu0 0
        %526 = vmatpush1.bf16.msra.mxu0 0
        %527 = vmatprep.subr.bf16.mxu0 0
        %528 = vmatpush1.bf16.msra.mxu0 0
        %529 = vmatprep.subr.bf16.mxu0 0
        %530 = vmatpush1.bf16.msra.mxu0 0
        %531 = vmatprep.subr.bf16.mxu0 0
        %532 = vmatpush1.bf16.msra.mxu0 0
        %533 = vmatprep.subr.bf16.mxu0 0
        %534 = vmatpush1.bf16.msra.mxu0 0
        %535 = vmatprep.subr.bf16.mxu0 0
        %536 = vmatpush1.bf16.msra.mxu0 0
        %537 = vmatprep.subr.bf16.mxu0 0
        %538 = vmatpush1.bf16.msra.mxu0 0
        %539 = vmatprep.mubr.bf16.mxu0 0
        %540 = vmatmul.mubr.bf16.gmra.mrb[0].mxu0 %v505
        %v541 = vpop.f32.mrb[0].mxu0
        %v542 = vadd.f32 %v496, %v541
        %v543 = vpop.f32.mrb[0].mxu0
        %v544 = vpop.f32.mrb[0].mxu0
        %v545 = vpop.f32.mrb[0].mxu0
        %546 = vdwg.mxu0
        %v547 = vmul.f32 %v542, 5.656854
        %v548 = vld [vmem:[%s1] sm:$0xff]
        %v549 = vadd.f32 %v547, %v548
        %vm550 = vcmask 261120
        %551 = vst.msk [vmem:[#allocation2] sm:$0xff] %vm550, %v549
      $region64: #{transformer_encoder_forward.1} parent=59 // pred_fallthru
        _
      %v552 = vld [vmem:[#allocation2] sm:$0xff]
      %v553 = vld [vmem:[%s476] sm:$0xff]
      %v554 = vld [vmem:[%s476 + $0x8] sm:$0x1]
      %v555 = vpack.c.bf16 %v552, %v552
      %v556 = vld [vmem:[%s453] sm:$0xf]
      %v557 = vld [vmem:[%s453 + $0x4] sm:$0xf]
      %v558 = vld [vmem:[%s453 + $0x8] sm:$0xf]
      %v559 = vld [vmem:[%s453 + $0xc] sm:$0xf]
      %v564 = vunpack.c.l.b16 %v556
      %v565 = vunpack.c.l.b16 %v557
      %v566 = vunpack.c.l.b16 %v558
      %v567 = vunpack.c.l.b16 %v559
      %v568 = vpack.c.b16 %v565, %v564
      %v569 = vpack.c.b16 %v567, %v566
      %vm572 = vcmask 261120
      %v574 = vsel %vm572, %v555, 0
      %576 = vmatprep.subr.bf16.mxu0 0
      %577 = vmatpush1.bf16.msra.mxu0 %v568
      %578 = vmatprep.subr.bf16.mxu0 0
      %579 = vmatpush1.bf16.msra.mxu0 %v569
      %580 = vmatprep.subr.bf16.mxu0 0
      %581 = vmatpush1.bf16.msra.mxu0 0
      %582 = vmatprep.subr.bf16.mxu0 0
      %583 = vmatpush1.bf16.msra.mxu0 0
      %584 = vmatprep.subr.bf16.mxu0 0
      %585 = vmatpush1.bf16.msra.mxu0 0
      %586 = vmatprep.subr.bf16.mxu0 0
      %587 = vmatpush1.bf16.msra.mxu0 0
      %588 = vmatprep.subr.bf16.mxu0 0
      %589 = vmatpush1.bf16.msra.mxu0 0
      %590 = vmatprep.subr.bf16.mxu0 0
      %591 = vmatpush1.bf16.msra.mxu0 0
      %592 = vmatprep.subr.bf16.mxu0 0
      %593 = vmatpush1.bf16.msra.mxu0 0
      %594 = vmatprep.subr.bf16.mxu0 0
      %595 = vmatpush1.bf16.msra.mxu0 0
      %596 = vmatprep.subr.bf16.mxu0 0
      %597 = vmatpush1.bf16.msra.mxu0 0
      %598 = vmatprep.subr.bf16.mxu0 0
      %599 = vmatpush1.bf16.msra.mxu0 0
      %600 = vmatprep.subr.bf16.mxu0 0
      %601 = vmatpush1.bf16.msra.mxu0 0
      %602 = vmatprep.subr.bf16.mxu0 0
      %603 = vmatpush1.bf16.msra.mxu0 0
      %604 = vmatprep.subr.bf16.mxu0 0
      %605 = vmatpush1.bf16.msra.mxu0 0
      %606 = vmatprep.subr.bf16.mxu0 0
      %607 = vmatpush1.bf16.msra.mxu0 0
      %608 = vmatprep.mubr.bf16.mxu0 0
      %609 = vmatmul.mubr.bf16.gmra.mrb[0].mxu0 %v574
      %v610 = vpop.f32.mrb[0].mxu0
      %v611 = vadd.f32 0.0, %v610
      %v612 = vpop.f32.mrb[0].mxu0
      %v613 = vpop.f32.mrb[0].mxu0
      %v614 = vpop.f32.mrb[0].mxu0
      %615 = vdwg.mxu0
      %v616 = vlaneseq
      %v617 = vshrl.u32 %v616, 7
      %v618 = vsub.s32 0, %v617
      %v619 = vrot.slane %v553, %v618
      %v620 = vadd.f32 %v611, %v619
      %v621 = vmul.f32 %v620, 0.35355338
      %v622 = vlaneseq
      %v623 = vshrl.u32 %v622, 7
      %v624 = vsub.s32 1, %v623
      %v625 = vrot.slane %v553, %v624
      %627 = vrot.lane.b32.xlu0 %v625, 32
      %v628 = vpop.permute.xlu0 %627
      %v630 = vadd.f32 %v611, %v628
      %v631 = vlaneseq
      %v632 = vshrl.u32 %v631, 7
      %v633 = vsub.s32 2, %v632
      %v634 = vrot.slane %v553, %v633
      %636 = vrot.lane.b32.xlu0 %v634, 64
      %v637 = vpop.permute.xlu0 %636
      %v639 = vadd.f32 %v611, %v637
      %v640 = vpack.c.bf16 %v630, %v630
      %vm641 = vcmp.ge.s32.totalorder %v483, 0
      %vm642 = vcmp.lt.s32.totalorder %v483, 8
      %vm643 = vmand %vm641, %vm642
      %v644 = vsel %vm643, 1, 0
      %v645 = vcvt.s32.f32 %v644
      %v646 = vmul.f32 %v621, %v645
      %v647 = vpack.c.bf16 %v646, %v646
      %649 = vrot.lane.b32.xlu0 %v640, 96
      %v650 = vpop.permute.xlu0 %649
      %v652 = vsel %vm572, %v647, 0
      %v655 = vsel %vm572, %v650, 0
      %657 = vmatprep.subr.bf16.mxu0 0
      %658 = vmatpush1.bf16.xpose.msra.mxu0 %v655
      %659 = vmatprep.subr.bf16.mxu0 0
      %660 = vmatpush1.bf16.xpose.msra.mxu0 0
      %661 = vmatprep.subr.bf16.mxu0 0
      %662 = vmatpush1.bf16.xpose.msra.mxu0 0
      %663 = vmatprep.subr.bf16.mxu0 0
      %664 = vmatpush1.bf16.xpose.msra.mxu0 0
      %665 = vmatprep.subr.bf16.mxu0 0
      %666 = vmatpush1.bf16.xpose.msra.mxu0 0
      %667 = vmatprep.subr.bf16.mxu0 0
      %668 = vmatpush1.bf16.xpose.msra.mxu0 0
      %669 = vmatprep.subr.bf16.mxu0 0
      %670 = vmatpush1.bf16.xpose.msra.mxu0 0
      %671 = vmatprep.subr.bf16.mxu0 0
      %672 = vmatpush1.bf16.xpose.msra.mxu0 0
      %673 = vmatprep.subr.bf16.mxu0 0
      %674 = vmatpush1.bf16.xpose.msra.mxu0 0
      %675 = vmatprep.subr.bf16.mxu0 0
      %676 = vmatpush1.bf16.xpose.msra.mxu0 0
      %677 = vmatprep.subr.bf16.mxu0 0
      %678 = vmatpush1.bf16.xpose.msra.mxu0 0
      %679 = vmatprep.subr.bf16.mxu0 0
      %680 = vmatpush1.bf16.xpose.msra.mxu0 0
      %681 = vmatprep.subr.bf16.mxu0 0
      %682 = vmatpush1.bf16.xpose.msra.mxu0 0
      %683 = vmatprep.subr.bf16.mxu0 0
      %684 = vmatpush1.bf16.xpose.msra.mxu0 0
      %685 = vmatprep.subr.bf16.mxu0 0
      %686 = vmatpush1.bf16.xpose.msra.mxu0 0
      %687 = vmatprep.subr.bf16.mxu0 0
      %688 = vmatpush1.bf16.xpose.msra.mxu0 0
      %689 = vmatprep.mubr.bf16.mxu0 0
      %690 = vmatmul.mubr.bf16.gmra.mrb[0].mxu0 %v652
      %v691 = vpop.f32.mrb[0].mxu0
      %v692 = vadd.f32 0.0, %v691
      %v693 = vpop.f32.mrb[0].mxu0
      %v694 = vpop.f32.mrb[0].mxu0
      %v695 = vpop.f32.mrb[0].mxu0
      %696 = vdwg.mxu0
      %vm697 = vcmask 64512
      %v698 = vsel %vm697, %v692, -inf
      %699 = vmax.xlane.f32.xlu0 %v698
      %v700 = vpop.xlane.xlu0 %699
      %v701 = vsub.f32 %v692, %v700
      %v702 = vmul.f32 %v701, 1.442695
      %v703 = vpow.pop %v702
      %v704 = vsel %vm697, %v703, 0.0
      %705 = vadd.xlane.f32.xlu0 %v704
      %v706 = vpop.xlane.xlu0 %705
      %v707 = vrcp.pop %v706
      %v708 = vmul.f32 %v703, %v707
      %v709 = vpack.c.bf16 %v708, %v708
      %711 = vrot.lane.b32.xlu0 %v645, 64
      %v712 = vpop.permute.xlu0 %711
      %v714 = vmul.f32 %v639, %v712
      %v715 = vpack.c.bf16 %v714, %v714
      %vm716 = vcmp.ge.s32.totalorder %v483, 8
      %vm717 = vcmp.lt.s32.totalorder %v483, 16
      %vm718 = vmand %vm716, %vm717
      %v719 = vsel %vm718, 1, 0
      %v720 = vcvt.s32.f32 %v719
      %v721 = vmul.f32 %v621, %v720
      %v722 = vpack.c.bf16 %v721, %v721
      %v724 = vsel %vm572, %v722, 0
      %726 = vmatprep.subr.bf16.mxu0 0
      %727 = vmatpush1.bf16.xpose.msra.mxu0 %v655
      %728 = vmatprep.subr.bf16.mxu0 0
      %729 = vmatpush1.bf16.xpose.msra.mxu0 0
      %730 = vmatprep.subr.bf16.mxu0 0
      %731 = vmatpush1.bf16.xpose.msra.mxu0 0
      %732 = vmatprep.subr.bf16.mxu0 0
      %733 = vmatpush1.bf16.xpose.msra.mxu0 0
      %734 = vmatprep.subr.bf16.mxu0 0
      %735 = vmatpush1.bf16.xpose.msra.mxu0 0
      %736 = vmatprep.subr.bf16.mxu0 0
      %737 = vmatpush1.bf16.xpose.msra.mxu0 0
      %738 = vmatprep.subr.bf16.mxu0 0
      %739 = vmatpush1.bf16.xpose.msra.mxu0 0
      %740 = vmatprep.subr.bf16.mxu0 0
      %741 = vmatpush1.bf16.xpose.msra.mxu0 0
      %742 = vmatprep.subr.bf16.mxu0 0
      %743 = vmatpush1.bf16.xpose.msra.mxu0 0
      %744 = vmatprep.subr.bf16.mxu0 0
      %745 = vmatpush1.bf16.xpose.msra.mxu0 0
      %746 = vmatprep.subr.bf16.mxu0 0
      %747 = vmatpush1.bf16.xpose.msra.mxu0 0
      %748 = vmatprep.subr.bf16.mxu0 0
      %749 = vmatpush1.bf16.xpose.msra.mxu0 0
      %750 = vmatprep.subr.bf16.mxu0 0
      %751 = vmatpush1.bf16.xpose.msra.mxu0 0
      %752 = vmatprep.subr.bf16.mxu0 0
      %753 = vmatpush1.bf16.xpose.msra.mxu0 0
      %754 = vmatprep.subr.bf16.mxu0 0
      %755 = vmatpush1.bf16.xpose.msra.mxu0 0
      %756 = vmatprep.subr.bf16.mxu0 0
      %757 = vmatpush1.bf16.xpose.msra.mxu0 0
      %758 = vmatprep.mubr.bf16.mxu0 0
      %759 = vmatmul.mubr.bf16.gmra.mrb[0].mxu0 %v724
      %v760 = vpop.f32.mrb[0].mxu0
      %v761 = vadd.f32 0.0, %v760
      %v762 = vpop.f32.mrb[0].mxu0
      %v763 = vpop.f32.mrb[0].mxu0
      %v764 = vpop.f32.mrb[0].mxu0
      %765 = vdwg.mxu0
      %v766 = vsel %vm697, %v761, -inf
      %767 = vmax.xlane.f32.xlu0 %v766
      %v768 = vpop.xlane.xlu0 %767
      %v769 = vsub.f32 %v761, %v768
      %v770 = vmul.f32 %v769, 1.442695
      %v771 = vpow.pop %v770
      %v772 = vsel %vm697, %v771, 0.0
      %773 = vadd.xlane.f32.xlu0 %v772
      %v774 = vpop.xlane.xlu0 %773
      %v775 = vrcp.pop %v774
      %v776 = vmul.f32 %v771, %v775
      %v777 = vpack.c.bf16 %v776, %v776
      %779 = vrot.lane.b32.xlu0 %v720, 64
      %v780 = vpop.permute.xlu0 %779
      %v782 = vmul.f32 %v639, %v780
      %v783 = vpack.c.bf16 %v782, %v782
      %785 = vrot.lane.b32.xlu0 %v783, 64
      %v786 = vpop.permute.xlu0 %785
      %v788 = vsel %vm697, %v777, 0
      %vm790 = vcmask 1043456
      %v792 = vsel %vm790, %v786, 0
      %794 = vmatprep.subr.bf16.mxu0 0
      %795 = vmatpush1.bf16.msra.mxu0 %v792
      %796 = vmatprep.subr.bf16.mxu0 0
      %797 = vmatpush1.bf16.msra.mxu0 0
      %798 = vmatprep.subr.bf16.mxu0 0
      %799 = vmatpush1.bf16.msra.mxu0 0
      %800 = vmatprep.subr.bf16.mxu0 0
      %801 = vmatpush1.bf16.msra.mxu0 0
      %802 = vmatprep.subr.bf16.mxu0 0
      %803 = vmatpush1.bf16.msra.mxu0 0
      %804 = vmatprep.subr.bf16.mxu0 0
      %805 = vmatpush1.bf16.msra.mxu0 0
      %806 = vmatprep.subr.bf16.mxu0 0
      %807 = vmatpush1.bf16.msra.mxu0 0
      %808 = vmatprep.subr.bf16.mxu0 0
      %809 = vmatpush1.bf16.msra.mxu0 0
      %810 = vmatprep.subr.bf16.mxu0 0
      %811 = vmatpush1.bf16.msra.mxu0 0
      %812 = vmatprep.subr.bf16.mxu0 0
      %813 = vmatpush1.bf16.msra.mxu0 0
      %814 = vmatprep.subr.bf16.mxu0 0
      %815 = vmatpush1.bf16.msra.mxu0 0
      %816 = vmatprep.subr.bf16.mxu0 0
      %817 = vmatpush1.bf16.msra.mxu0 0
      %818 = vmatprep.subr.bf16.mxu0 0
      %819 = vmatpush1.bf16.msra.mxu0 0
      %820 = vmatprep.subr.bf16.mxu0 0
      %821 = vmatpush1.bf16.msra.mxu0 0
      %822 = vmatprep.subr.bf16.mxu0 0
      %823 = vmatpush1.bf16.msra.mxu0 0
      %824 = vmatprep.subr.bf16.mxu0 0
      %825 = vmatpush1.bf16.msra.mxu0 0
      %826 = vmatprep.mubr.bf16.mxu0 0
      %827 = vmatmul.mubr.bf16.gmra.mrb[0].mxu0 %v788
      %v828 = vpop.f32.mrb[0].mxu0
      %v829 = vadd.f32 0.0, %v828
      %v830 = vpop.f32.mrb[0].mxu0
      %v831 = vpop.f32.mrb[0].mxu0
      %v832 = vpop.f32.mrb[0].mxu0
      %833 = vdwg.mxu0
      %835 = vrot.lane.b32.xlu0 %v715, 64
      %v836 = vpop.permute.xlu0 %835
      %v838 = vsel %vm697, %v709, 0
      %v841 = vsel %vm790, %v836, 0
      %843 = vmatprep.subr.bf16.mxu0 0
      %844 = vmatpush1.bf16.msra.mxu0 %v841
      %845 = vmatprep.subr.bf16.mxu0 0
      %846 = vmatpush1.bf16.msra.mxu0 0
      %847 = vmatprep.subr.bf16.mxu0 0
      %848 = vmatpush1.bf16.msra.mxu0 0
      %849 = vmatprep.subr.bf16.mxu0 0
      %850 = vmatpush1.bf16.msra.mxu0 0
      %851 = vmatprep.subr.bf16.mxu0 0
      %852 = vmatpush1.bf16.msra.mxu0 0
      %853 = vmatprep.subr.bf16.mxu0 0
      %854 = vmatpush1.bf16.msra.mxu0 0
      %855 = vmatprep.subr.bf16.mxu0 0
      %856 = vmatpush1.bf16.msra.mxu0 0
      %857 = vmatprep.subr.bf16.mxu0 0
      %858 = vmatpush1.bf16.msra.mxu0 0
      %859 = vmatprep.subr.bf16.mxu0 0
      %860 = vmatpush1.bf16.msra.mxu0 0
      %861 = vmatprep.subr.bf16.mxu0 0
      %862 = vmatpush1.bf16.msra.mxu0 0
      %863 = vmatprep.subr.bf16.mxu0 0
      %864 = vmatpush1.bf16.msra.mxu0 0
      %865 = vmatprep.subr.bf16.mxu0 0
      %866 = vmatpush1.bf16.msra.mxu0 0
      %867 = vmatprep.subr.bf16.mxu0 0
      %868 = vmatpush1.bf16.msra.mxu0 0
      %869 = vmatprep.subr.bf16.mxu0 0
      %870 = vmatpush1.bf16.msra.mxu0 0
      %871 = vmatprep.subr.bf16.mxu0 0
      %872 = vmatpush1.bf16.msra.mxu0 0
      %873 = vmatprep.subr.bf16.mxu0 0
      %874 = vmatpush1.bf16.msra.mxu0 0
      %875 = vmatprep.mubr.bf16.mxu0 0
      %876 = vmatmul.mubr.bf16.gmra.mrb[0].mxu0 %v838
      %v877 = vpop.f32.mrb[0].mxu0
      %v878 = vadd.f32 %v829, %v877
      %v879 = vpop.f32.mrb[0].mxu0
      %v880 = vpop.f32.mrb[0].mxu0
      %v881 = vpop.f32.mrb[0].mxu0
      %882 = vdwg.mxu0
      %vm883 = vcmp.ge.s32.totalorder %v483, 16
      %vm884 = vcmp.lt.s32.totalorder %v483, 24
      %vm885 = vmand %vm883, %vm884
      %v886 = vsel %vm885, 1, 0
      %v887 = vcvt.s32.f32 %v886
      %v888 = vmul.f32 %v621, %v887
      %v889 = vpack.c.bf16 %v888, %v888
      %v891 = vsel %vm572, %v889, 0
      %893 = vmatprep.subr.bf16.mxu0 0
      %894 = vmatpush1.bf16.xpose.msra.mxu0 %v655
      %895 = vmatprep.subr.bf16.mxu0 0
      %896 = vmatpush1.bf16.xpose.msra.mxu0 0
      %897 = vmatprep.subr.bf16.mxu0 0
      %898 = vmatpush1.bf16.xpose.msra.mxu0 0
      %899 = vmatprep.subr.bf16.mxu0 0
      %900 = vmatpush1.bf16.xpose.msra.mxu0 0
      %901 = vmatprep.subr.bf16.mxu0 0
      %902 = vmatpush1.bf16.xpose.msra.mxu0 0
      %903 = vmatprep.subr.bf16.mxu0 0
      %904 = vmatpush1.bf16.xpose.msra.mxu0 0
      %905 = vmatprep.subr.bf16.mxu0 0
      %906 = vmatpush1.bf16.xpose.msra.mxu0 0
      %907 = vmatprep.subr.bf16.mxu0 0
      %908 = vmatpush1.bf16.xpose.msra.mxu0 0
      %909 = vmatprep.subr.bf16.mxu0 0
      %910 = vmatpush1.bf16.xpose.msra.mxu0 0
      %911 = vmatprep.subr.bf16.mxu0 0
      %912 = vmatpush1.bf16.xpose.msra.mxu0 0
      %913 = vmatprep.subr.bf16.mxu0 0
      %914 = vmatpush1.bf16.xpose.msra.mxu0 0
      %915 = vmatprep.subr.bf16.mxu0 0
      %916 = vmatpush1.bf16.xpose.msra.mxu0 0
      %917 = vmatprep.subr.bf16.mxu0 0
      %918 = vmatpush1.bf16.xpose.msra.mxu0 0
      %919 = vmatprep.subr.bf16.mxu0 0
      %920 = vmatpush1.bf16.xpose.msra.mxu0 0
      %921 = vmatprep.subr.bf16.mxu0 0
      %922 = vmatpush1.bf16.xpose.msra.mxu0 0
      %923 = vmatprep.subr.bf16.mxu0 0
      %924 = vmatpush1.bf16.xpose.msra.mxu0 0
      %925 = vmatprep.mubr.bf16.mxu0 0
      %926 = vmatmul.mubr.bf16.gmra.mrb[0].mxu0 %v891
      %v927 = vpop.f32.mrb[0].mxu0
      %v928 = vadd.f32 0.0, %v927
      %v929 = vpop.f32.mrb[0].mxu0
      %v930 = vpop.f32.mrb[0].mxu0
      %v931 = vpop.f32.mrb[0].mxu0
      %932 = vdwg.mxu0
      %v933 = vsel %vm697, %v928, -inf
      %934 = vmax.xlane.f32.xlu0 %v933
      %v935 = vpop.xlane.xlu0 %934
      %v936 = vsub.f32 %v928, %v935
      %v937 = vmul.f32 %v936, 1.442695
      %v938 = vpow.pop %v937
      %v939 = vsel %vm697, %v938, 0.0
      %940 = vadd.xlane.f32.xlu0 %v939
      %v941 = vpop.xlane.xlu0 %940
      %v942 = vrcp.pop %v941
      %v943 = vmul.f32 %v938, %v942
      %v944 = vpack.c.bf16 %v943, %v943
      %946 = vrot.lane.b32.xlu0 %v887, 64
      %v947 = vpop.permute.xlu0 %946
      %v949 = vmul.f32 %v639, %v947
      %v950 = vpack.c.bf16 %v949, %v949
      %952 = vrot.lane.b32.xlu0 %v950, 64
      %v953 = vpop.permute.xlu0 %952
      %v955 = vsel %vm697, %v944, 0
      %v958 = vsel %vm790, %v953, 0
      %960 = vmatprep.subr.bf16.mxu0 0
      %961 = vmatpush1.bf16.msra.mxu0 %v958
      %962 = vmatprep.subr.bf16.mxu0 0
      %963 = vmatpush1.bf16.msra.mxu0 0
      %964 = vmatprep.subr.bf16.mxu0 0
      %965 = vmatpush1.bf16.msra.mxu0 0
      %966 = vmatprep.subr.bf16.mxu0 0
      %967 = vmatpush1.bf16.msra.mxu0 0
      %968 = vmatprep.subr.bf16.mxu0 0
      %969 = vmatpush1.bf16.msra.mxu0 0
      %970 = vmatprep.subr.bf16.mxu0 0
      %971 = vmatpush1.bf16.msra.mxu0 0
      %972 = vmatprep.subr.bf16.mxu0 0
      %973 = vmatpush1.bf16.msra.mxu0 0
      %974 = vmatprep.subr.bf16.mxu0 0
      %975 = vmatpush1.bf16.msra.mxu0 0
      %976 = vmatprep.subr.bf16.mxu0 0
      %977 = vmatpush1.bf16.msra.mxu0 0
      %978 = vmatprep.subr.bf16.mxu0 0
      %979 = vmatpush1.bf16.msra.mxu0 0
      %980 = vmatprep.subr.bf16.mxu0 0
      %981 = vmatpush1.bf16.msra.mxu0 0
      %982 = vmatprep.subr.bf16.mxu0 0
      %983 = vmatpush1.bf16.msra.mxu0 0
      %984 = vmatprep.subr.bf16.mxu0 0
      %985 = vmatpush1.bf16.msra.mxu0 0
      %986 = vmatprep.subr.bf16.mxu0 0
      %987 = vmatpush1.bf16.msra.mxu0 0
      %988 = vmatprep.subr.bf16.mxu0 0
      %989 = vmatpush1.bf16.msra.mxu0 0
      %990 = vmatprep.subr.bf16.mxu0 0
      %991 = vmatpush1.bf16.msra.mxu0 0
      %992 = vmatprep.mubr.bf16.mxu0 0
      %993 = vmatmul.mubr.bf16.gmra.mrb[0].mxu0 %v955
      %v994 = vpop.f32.mrb[0].mxu0
      %v995 = vadd.f32 0.0, %v994
      %v996 = vpop.f32.mrb[0].mxu0
      %v997 = vpop.f32.mrb[0].mxu0
      %v998 = vpop.f32.mrb[0].mxu0
      %999 = vdwg.mxu0
      %v1000 = vadd.f32 %v878, %v995
      %vm1001 = vcmp.ge.s32.totalorder %v483, 24
      %vm1002 = vcmp.lt.s32.totalorder %v483, 32
      %vm1003 = vmand %vm1001, %vm1002
      %v1004 = vsel %vm1003, 1, 0
      %v1005 = vcvt.s32.f32 %v1004
      %v1006 = vmul.f32 %v621, %v1005
      %v1007 = vpack.c.bf16 %v1006, %v1006
      %v1009 = vsel %vm572, %v1007, 0
      %1011 = vmatprep.subr.bf16.mxu0 0
      %1012 = vmatpush1.bf16.xpose.msra.mxu0 %v655
      %1013 = vmatprep.subr.bf16.mxu0 0
      %1014 = vmatpush1.bf16.xpose.msra.mxu0 0
      %1015 = vmatprep.subr.bf16.mxu0 0
      %1016 = vmatpush1.bf16.xpose.msra.mxu0 0
      %1017 = vmatprep.subr.bf16.mxu0 0
      %1018 = vmatpush1.bf16.xpose.msra.mxu0 0
      %1019 = vmatprep.subr.bf16.mxu0 0
      %1020 = vmatpush1.bf16.xpose.msra.mxu0 0
      %1021 = vmatprep.subr.bf16.mxu0 0
      %1022 = vmatpush1.bf16.xpose.msra.mxu0 0
      %1023 = vmatprep.subr.bf16.mxu0 0
      %1024 = vmatpush1.bf16.xpose.msra.mxu0 0
      %1025 = vmatprep.subr.bf16.mxu0 0
      %1026 = vmatpush1.bf16.xpose.msra.mxu0 0
      %1027 = vmatprep.subr.bf16.mxu0 0
      %1028 = vmatpush1.bf16.xpose.msra.mxu0 0
      %1029 = vmatprep.subr.bf16.mxu0 0
      %1030 = vmatpush1.bf16.xpose.msra.mxu0 0
      %1031 = vmatprep.subr.bf16.mxu0 0
      %1032 = vmatpush1.bf16.xpose.msra.mxu0 0
      %1033 = vmatprep.subr.bf16.mxu0 0
      %1034 = vmatpush1.bf16.xpose.msra.mxu0 0
      %1035 = vmatprep.subr.bf16.mxu0 0
      %1036 = vmatpush1.bf16.xpose.msra.mxu0 0
      %1037 = vmatprep.subr.bf16.mxu0 0
      %1038 = vmatpush1.bf16.xpose.msra.mxu0 0
      %1039 = vmatprep.subr.bf16.mxu0 0
      %1040 = vmatpush1.bf16.xpose.msra.mxu0 0
      %1041 = vmatprep.subr.bf16.mxu0 0
      %1042 = vmatpush1.bf16.xpose.msra.mxu0 0
      %1043 = vmatprep.mubr.bf16.mxu0 0
      %1044 = vmatmul.mubr.bf16.gmra.mrb[0].mxu0 %v1009
      %v1045 = vpop.f32.mrb[0].mxu0
      %v1046 = vadd.f32 0.0, %v1045
      %v1047 = vpop.f32.mrb[0].mxu0
      %v1048 = vpop.f32.mrb[0].mxu0
      %v1049 = vpop.f32.mrb[0].mxu0
      %1050 = vdwg.mxu0
      %v1051 = vsel %vm697, %v1046, -inf
      %1052 = vmax.xlane.f32.xlu0 %v1051
      %v1053 = vpop.xlane.xlu0 %1052
      %v1054 = vsub.f32 %v1046, %v1053
      %v1055 = vmul.f32 %v1054, 1.442695
      %v1056 = vpow.pop %v1055
      %v1057 = vsel %vm697, %v1056, 0.0
      %1058 = vadd.xlane.f32.xlu0 %v1057
      %v1059 = vpop.xlane.xlu0 %1058
      %v1060 = vrcp.pop %v1059
      %v1061 = vmul.f32 %v1056, %v1060
      %v1062 = vpack.c.bf16 %v1061, %v1061
      %1064 = vrot.lane.b32.xlu0 %v1005, 64
      %v1065 = vpop.permute.xlu0 %1064
      %v1067 = vmul.f32 %v639, %v1065
      %v1068 = vpack.c.bf16 %v1067, %v1067
      %1070 = vrot.lane.b32.xlu0 %v1068, 64
      %v1071 = vpop.permute.xlu0 %1070
      %v1073 = vsel %vm697, %v1062, 0
      %v1076 = vsel %vm790, %v1071, 0
      %1078 = vmatprep.subr.bf16.mxu0 0
      %1079 = vmatpush1.bf16.msra.mxu0 %v1076
      %1080 = vmatprep.subr.bf16.mxu0 0
      %1081 = vmatpush1.bf16.msra.mxu0 0
      %1082 = vmatprep.subr.bf16.mxu0 0
      %1083 = vmatpush1.bf16.msra.mxu0 0
      %1084 = vmatprep.subr.bf16.mxu0 0
      %1085 = vmatpush1.bf16.msra.mxu0 0
      %1086 = vmatprep.subr.bf16.mxu0 0
      %1087 = vmatpush1.bf16.msra.mxu0 0
      %1088 = vmatprep.subr.bf16.mxu0 0
      %1089 = vmatpush1.bf16.msra.mxu0 0
      %1090 = vmatprep.subr.bf16.mxu0 0
      %1091 = vmatpush1.bf16.msra.mxu0 0
      %1092 = vmatprep.subr.bf16.mxu0 0
      %1093 = vmatpush1.bf16.msra.mxu0 0
      %1094 = vmatprep.subr.bf16.mxu0 0
      %1095 = vmatpush1.bf16.msra.mxu0 0
      %1096 = vmatprep.subr.bf16.mxu0 0
      %1097 = vmatpush1.bf16.msra.mxu0 0
      %1098 = vmatprep.subr.bf16.mxu0 0
      %1099 = vmatpush1.bf16.msra.mxu0 0
      %1100 = vmatprep.subr.bf16.mxu0 0
      %1101 = vmatpush1.bf16.msra.mxu0 0
      %1102 = vmatprep.subr.bf16.mxu0 0
      %1103 = vmatpush1.bf16.msra.mxu0 0
      %1104 = vmatprep.subr.bf16.mxu0 0
      %1105 = vmatpush1.bf16.msra.mxu0 0
      %1106 = vmatprep.subr.bf16.mxu0 0
      %1107 = vmatpush1.bf16.msra.mxu0 0
      %1108 = vmatprep.subr.bf16.mxu0 0
      %1109 = vmatpush1.bf16.msra.mxu0 0
      %1110 = vmatprep.mubr.bf16.mxu0 0
      %1111 = vmatmul.mubr.bf16.gmra.mrb[0].mxu0 %v1073
      %v1112 = vpop.f32.mrb[0].mxu0
      %v1113 = vadd.f32 0.0, %v1112
      %v1114 = vpop.f32.mrb[0].mxu0
      %v1115 = vpop.f32.mrb[0].mxu0
      %v1116 = vpop.f32.mrb[0].mxu0
      %1117 = vdwg.mxu0
      %v1118 = vadd.f32 %v1000, %v1113
      %v1119 = vpack.c.bf16 %v1118, %v1118
      %v1120 = vld [vmem:[%s458] sm:$0xf]
      %v1121 = vld [vmem:[%s458 + $0x4] sm:$0xf]
      %v1122 = vld [vmem:[%s458 + $0x8] sm:$0xf]
      %v1123 = vld [vmem:[%s458 + $0xc] sm:$0xf]
      %v1124 = vlaneseq
      %v1125 = vshrl.u32 %v1124, 7
      %v1126 = vsub.s32 3, %v1125
      %v1127 = vrot.slane %v553, %v1126
      %v1132 = vunpack.c.l.b16 %v1120
      %v1133 = vunpack.c.l.b16 %v1121
      %v1134 = vunpack.c.l.b16 %v1122
      %v1135 = vunpack.c.l.b16 %v1123
      %v1136 = vpack.c.b16 %v1133, %v1132
      %v1137 = vpack.c.b16 %v1135, %v1134
      %v1141 = vsel %vm572, %v1119, 0
      %1143 = vmatprep.subr.bf16.mxu0 0
      %1144 = vmatpush1.bf16.msra.mxu0 %v1136
      %1145 = vmatprep.subr.bf16.mxu0 0
      %1146 = vmatpush1.bf16.msra.mxu0 %v1137
      %1147 = vmatprep.subr.bf16.mxu0 0
      %1148 = vmatpush1.bf16.msra.mxu0 0
      %1149 = vmatprep.subr.bf16.mxu0 0
      %1150 = vmatpush1.bf16.msra.mxu0 0
      %1151 = vmatprep.subr.bf16.mxu0 0
      %1152 = vmatpush1.bf16.msra.mxu0 0
      %1153 = vmatprep.subr.bf16.mxu0 0
      %1154 = vmatpush1.bf16.msra.mxu0 0
      %1155 = vmatprep.subr.bf16.mxu0 0
      %1156 = vmatpush1.bf16.msra.mxu0 0
      %1157 = vmatprep.subr.bf16.mxu0 0
      %1158 = vmatpush1.bf16.msra.mxu0 0
      %1159 = vmatprep.subr.bf16.mxu0 0
      %1160 = vmatpush1.bf16.msra.mxu0 0
      %1161 = vmatprep.subr.bf16.mxu0 0
      %1162 = vmatpush1.bf16.msra.mxu0 0
      %1163 = vmatprep.subr.bf16.mxu0 0
      %1164 = vmatpush1.bf16.msra.mxu0 0
      %1165 = vmatprep.subr.bf16.mxu0 0
      %1166 = vmatpush1.bf16.msra.mxu0 0
      %1167 = vmatprep.subr.bf16.mxu0 0
      %1168 = vmatpush1.bf16.msra.mxu0 0
      %1169 = vmatprep.subr.bf16.mxu0 0
      %1170 = vmatpush1.bf16.msra.mxu0 0
      %1171 = vmatprep.subr.bf16.mxu0 0
      %1172 = vmatpush1.bf16.msra.mxu0 0
      %1173 = vmatprep.subr.bf16.mxu0 0
      %1174 = vmatpush1.bf16.msra.mxu0 0
      %1175 = vmatprep.mubr.bf16.mxu0 0
      %1176 = vmatmul.mubr.bf16.gmra.mrb[0].mxu0 %v1141
      %v1177 = vpop.f32.mrb[0].mxu0
      %v1178 = vadd.f32 %v1127, %v1177
      %v1179 = vpop.f32.mrb[0].mxu0
      %v1180 = vpop.f32.mrb[0].mxu0
      %v1181 = vpop.f32.mrb[0].mxu0
      %1182 = vdwg.mxu0
      %v1183 = vadd.f32 %v552, %v1178
      %v1184 = vsel %vm572, %v1183, 0.0
      %1185 = vadd.xlane.f32.xlu0 %v1184
      %v1186 = vpop.xlane.xlu0 %1185
      %v1187 = vrcp.pop 32.0
      %v1188 = vmul.f32 %v1186, %v1187
      %v1189 = vsub.f32 %v1183, %v1188
      %v1190 = vmul.f32 %v1189, %v1189
      %v1191 = vsel %vm572, %v1190, 0.0
      %1192 = vadd.xlane.f32.xlu0 %v1191
      %v1193 = vpop.xlane.xlu0 %1192
      %v1194 = vmul.f32 %v1193, %v1187
      %v1195 = vadd.f32 %v1194, 1e-05
      %v1196 = vrsqrt.pop %v1195
      %v1197 = vmul.f32 %v1189, %v1196
      %v1198 = vlaneseq
      %v1199 = vshrl.u32 %v1198, 7
      %v1200 = vsub.s32 5, %v1199
      %v1201 = vrot.slane %v553, %v1200
      %v1202 = vmul.f32 %v1197, %v1201
      %v1203 = vlaneseq
      %v1204 = vshrl.u32 %v1203, 7
      %v1205 = vsub.s32 6, %v1204
      %v1206 = vrot.slane %v553, %v1205
      %v1207 = vadd.f32 %v1202, %v1206
      %v1208 = vpack.c.bf16 %v1207, %v1207
      %v1209 = vld [vmem:[%s463] sm:$0xf]
      %v1210 = vld [vmem:[%s463 + $0x4] sm:$0xf]
      %v1211 = vld [vmem:[%s463 + $0x8] sm:$0xf]
      %v1212 = vld [vmem:[%s463 + $0xc] sm:$0xf]
      %v1213 = vld [vmem:[%s471] sm:$0x1]
      %v1215 = vlaneseq
      %v1216 = vshrl.u32 %v1215, 7
      %v1217 = vsub.s32 0, %v1216
      %v1218 = vrot.slane %v1213, %v1217
      %v1224 = vunpack.c.l.b16 %v1209
      %v1225 = vunpack.c.l.b16 %v1210
      %v1226 = vunpack.c.l.b16 %v1211
      %v1227 = vunpack.c.l.b16 %v1212
      %v1228 = vpack.c.b16 %v1225, %v1224
      %v1229 = vpack.c.b16 %v1227, %v1226
      %v1233 = vsel %vm572, %v1208, 0
      %1235 = vmatprep.subr.bf16.mxu0 0
      %1236 = vmatpush1.bf16.msra.mxu0 %v1228
      %1237 = vmatprep.subr.bf16.mxu0 0
      %1238 = vmatpush1.bf16.msra.mxu0 %v1229
      %1239 = vmatprep.subr.bf16.mxu0 0
      %1240 = vmatpush1.bf16.msra.mxu0 0
      %1241 = vmatprep.subr.bf16.mxu0 0
      %1242 = vmatpush1.bf16.msra.mxu0 0
      %1243 = vmatprep.subr.bf16.mxu0 0
      %1244 = vmatpush1.bf16.msra.mxu0 0
      %1245 = vmatprep.subr.bf16.mxu0 0
      %1246 = vmatpush1.bf16.msra.mxu0 0
      %1247 = vmatprep.subr.bf16.mxu0 0
      %1248 = vmatpush1.bf16.msra.mxu0 0
      %1249 = vmatprep.subr.bf16.mxu0 0
      %1250 = vmatpush1.bf16.msra.mxu0 0
      %1251 = vmatprep.subr.bf16.mxu0 0
      %1252 = vmatpush1.bf16.msra.mxu0 0
      %1253 = vmatprep.subr.bf16.mxu0 0
      %1254 = vmatpush1.bf16.msra.mxu0 0
      %1255 = vmatprep.subr.bf16.mxu0 0
      %1256 = vmatpush1.bf16.msra.mxu0 0
      %1257 = vmatprep.subr.bf16.mxu0 0
      %1258 = vmatpush1.bf16.msra.mxu0 0
      %1259 = vmatprep.subr.bf16.mxu0 0
      %1260 = vmatpush1.bf16.msra.mxu0 0
      %1261 = vmatprep.subr.bf16.mxu0 0
      %1262 = vmatpush1.bf16.msra.mxu0 0
      %1263 = vmatprep.subr.bf16.mxu0 0
      %1264 = vmatpush1.bf16.msra.mxu0 0
      %1265 = vmatprep.subr.bf16.mxu0 0
      %1266 = vmatpush1.bf16.msra.mxu0 0
      %1267 = vmatprep.mubr.bf16.mxu0 0
      %1268 = vmatmul.mubr.bf16.gmra.mrb[0].mxu0 %v1233
      %v1269 = vpop.f32.mrb[0].mxu0
      %v1270 = vadd.f32 %v1218, %v1269
      %v1271 = vpop.f32.mrb[0].mxu0
      %v1272 = vpop.f32.mrb[0].mxu0
      %v1273 = vpop.f32.mrb[0].mxu0
      %1274 = vdwg.mxu0
      %v1275 = vmax.f32 %v1270, 0.0
      %v1276 = vpack.c.bf16 %v1275, %v1275
      %v1277 = vld [vmem:[%s468] sm:$0xf]
      %v1278 = vld [vmem:[%s468 + $0x4] sm:$0xf]
      %v1279 = vld [vmem:[%s468 + $0x8] sm:$0xf]
      %v1280 = vld [vmem:[%s468 + $0xc] sm:$0xf]
      %v1281 = vld [vmem:[%s468 + $0x10] sm:$0xf]
      %v1282 = vld [vmem:[%s468 + $0x14] sm:$0xf]
      %v1283 = vld [vmem:[%s468 + $0x18] sm:$0xf]
      %v1284 = vld [vmem:[%s468 + $0x1c] sm:$0xf]
      %v1285 = vlaneseq
      %v1286 = vshrl.u32 %v1285, 7
      %v1287 = vsub.s32 4, %v1286
      %v1288 = vrot.slane %v553, %v1287
      %v1297 = vunpack.c.l.b16 %v1277
      %v1298 = vunpack.c.l.b16 %v1278
      %v1299 = vunpack.c.l.b16 %v1279
      %v1300 = vunpack.c.l.b16 %v1280
      %v1301 = vunpack.c.l.b16 %v1281
      %v1302 = vunpack.c.l.b16 %v1282
      %v1303 = vunpack.c.l.b16 %v1283
      %v1304 = vunpack.c.l.b16 %v1284
      %v1305 = vpack.c.b16 %v1298, %v1297
      %v1306 = vpack.c.b16 %v1300, %v1299
      %v1307 = vpack.c.b16 %v1302, %v1301
      %v1308 = vpack.c.b16 %v1304, %v1303
      %vm1313 = vcmask 523264
      %v1315 = vsel %vm1313, %v1276, 0
      %1317 = vmatprep.subr.bf16.mxu0 0
      %1318 = vmatpush1.bf16.msra.mxu0 %v1305
      %1319 = vmatprep.subr.bf16.mxu0 0
      %1320 = vmatpush1.bf16.msra.mxu0 %v1306
      %1321 = vmatprep.subr.bf16.mxu0 0
      %1322 = vmatpush1.bf16.msra.mxu0 %v1307
      %1323 = vmatprep.subr.bf16.mxu0 0
      %1324 = vmatpush1.bf16.msra.mxu0 %v1308
      %1325 = vmatprep.subr.bf16.mxu0 0
      %1326 = vmatpush1.bf16.msra.mxu0 0
      %1327 = vmatprep.subr.bf16.mxu0 0
      %1328 = vmatpush1.bf16.msra.mxu0 0
      %1329 = vmatprep.subr.bf16.mxu0 0
      %1330 = vmatpush1.bf16.msra.mxu0 0
      %1331 = vmatprep.subr.bf16.mxu0 0
      %1332 = vmatpush1.bf16.msra.mxu0 0
      %1333 = vmatprep.subr.bf16.mxu0 0
      %1334 = vmatpush1.bf16.msra.mxu0 0
      %1335 = vmatprep.subr.bf16.mxu0 0
      %1336 = vmatpush1.bf16.msra.mxu0 0
      %1337 = vmatprep.subr.bf16.mxu0 0
      %1338 = vmatpush1.bf16.msra.mxu0 0
      %1339 = vmatprep.subr.bf16.mxu0 0
      %1340 = vmatpush1.bf16.msra.mxu0 0
      %1341 = vmatprep.subr.bf16.mxu0 0
      %1342 = vmatpush1.bf16.msra.mxu0 0
      %1343 = vmatprep.subr.bf16.mxu0 0
      %1344 = vmatpush1.bf16.msra.mxu0 0
      %1345 = vmatprep.subr.bf16.mxu0 0
      %1346 = vmatpush1.bf16.msra.mxu0 0
      %1347 = vmatprep.subr.bf16.mxu0 0
      %1348 = vmatpush1.bf16.msra.mxu0 0
      %1349 = vmatprep.mubr.bf16.mxu0 0
      %1350 = vmatmul.mubr.bf16.gmra.mrb[0].mxu0 %v1315
      %v1351 = vpop.f32.mrb[0].mxu0
      %v1352 = vadd.f32 %v1288, %v1351
      %v1353 = vpop.f32.mrb[0].mxu0
      %v1354 = vpop.f32.mrb[0].mxu0
      %v1355 = vpop.f32.mrb[0].mxu0
      %1356 = vdwg.mxu0
      %v1357 = vadd.f32 %v1207, %v1352
      %v1358 = vsel %vm572, %v1357, 0.0
      %1359 = vadd.xlane.f32.xlu0 %v1358
      %v1360 = vpop.xlane.xlu0 %1359
      %v1361 = vmul.f32 %v1360, %v1187
      %v1362 = vsub.f32 %v1357, %v1361
      %v1363 = vmul.f32 %v1362, %v1362
      %v1364 = vsel %vm572, %v1363, 0.0
      %1365 = vadd.xlane.f32.xlu0 %v1364
      %v1366 = vpop.xlane.xlu0 %1365
      %v1367 = vmul.f32 %v1366, %v1187
      %v1368 = vadd.f32 %v1367, 1e-05
      %v1369 = vrsqrt.pop %v1368
      %v1370 = vmul.f32 %v1362, %v1369
      %v1371 = vlaneseq
      %v1372 = vshrl.u32 %v1371, 7
      %v1373 = vsub.s32 7, %v1372
      %v1374 = vrot.slane %v553, %v1373
      %v1375 = vmul.f32 %v1370, %v1374
      %v1376 = vlaneseq
      %v1377 = vshrl.u32 %v1376, 7
      %v1378 = vsub.s32 0, %v1377
      %v1379 = vrot.slane %v554, %v1378
      %v1380 = vadd.f32 %v1375, %v1379
      %1381 = vst.msk [vmem:[#allocation2] sm:$0xff] %vm572, %v1380
      %p1382 = scmp.eq.s32.totalorder %s26, 1
      // Predicated region
      $region65: #{transformer_encoder_forward.1} parent=59 // pred_check
        %p1383 = pneg %p1382
      $region66: #{transformer_encoder_forward.1} parent=59 // pred_check_branch
        %1385 = sbr.rel (%p1383) target = $region68
      $region67: #{transformer_encoder_forward.1} parent=59 // pred_region
        %v1386 = vld [vmem:[%s3 + $0x1] sm:$0x1]
        %v1387 = vld [vmem:[%s3 + $0x2] sm:$0x1]
        %v1388 = vsel %vm572, %v1380, 0.0
        %1389 = vadd.xlane.f32.xlu0 %v1388
        %v1390 = vpop.xlane.xlu0 %1389
        %v1391 = vmul.f32 %v1390, %v1187
        %v1392 = vsub.f32 %v1380, %v1391
        %v1393 = vmul.f32 %v1392, %v1392
        %v1394 = vsel %vm572, %v1393, 0.0
        %1395 = vadd.xlane.f32.xlu0 %v1394
        %v1396 = vpop.xlane.xlu0 %1395
        %v1397 = vmul.f32 %v1396, %v1187
        %v1398 = vadd.f32 %v1397, 1e-05
        %v1399 = vrsqrt.pop %v1398
        %v1400 = vmul.f32 %v1392, %v1399
        %v1401 = vlaneseq
        %v1402 = vshrl.u32 %v1401, 7
        %v1403 = vsub.s32 0, %v1402
        %v1404 = vrot.slane %v1386, %v1403
        %v1405 = vmul.f32 %v1400, %v1404
        %v1406 = vlaneseq
        %v1407 = vshrl.u32 %v1406, 7
        %v1408 = vsub.s32 0, %v1407
        %v1409 = vrot.slane %v1387, %v1408
        %v1410 = vadd.f32 %v1405, %v1409
        %1411 = vst.msk [vmem:[%s480] sm:$0xff] %vm572, %v1410
      $region68: #{transformer_encoder_forward.1} parent=59 // pred_fallthru
        _
      %p1412 = scmp.lt.s32.totalorder %s25, 1
      %s1413 = scalar_select %p1412, %s25, 1
      %s1414 = smul.addr %s1413, 8
      %s1415 = scalar_lea.vmem %s10, %s1414
      // Predicated region
      $region69: #{transformer_encoder_forward.1} parent=59 // pred_check
        %p1416 = pneg %p296
      $region70: #{transformer_encoder_forward.1} parent=59 // pred_check_branch
        %1418 = sbr.rel (%p1416) target = $region72
      $region71: #{transformer_encoder_forward.1} parent=59 // pred_region
        _
      $region72: #{transformer_encoder_forward.1} parent=59 // pred_fallthru
        _
    $region60: #{transformer_encoder_forward.1} parent=5 // pred_fallthru
      _
    %p1419 = scmp.le.s32.totalorder 2, %s16
    // Predicated region
    $region73: #{transformer_encoder_forward.1} parent=5 // pred_check
      %p1420 = pneg %p1419
    $region74: #{transformer_encoder_forward.1} parent=5 // pred_check_branch
      %1422 = sbr.rel (%p1420) target = $region76
    $region75: #{transformer_encoder_forward.1} parent=5 // pred_region
      %s1423 = ssub.s32 %s16, 2
      // Predicated region
      $region77: #{transformer_encoder_forward.1} parent=75 // pred_check
        %p1424 = pneg %p302
      $region78: #{transformer_encoder_forward.1} parent=75 // pred_check_branch
        %1426 = sbr.rel (%p1424) target = $region80
      $region79: #{transformer_encoder_forward.1} parent=75 // pred_region
        %p1427 = scmp.lt.s32.totalorder %s27, 1
        %s1428 = scalar_select %p1427, %s27, 1
        %s1429 = smul.addr %s1428, 8
        %s1430 = scalar_lea.vmem %s10, %s1429
      $region80: #{transformer_encoder_forward.1} parent=75 // pred_fallthru
        _
    $region76: #{transformer_encoder_forward.1} parent=5 // pred_fallthru
      _
  $region6: #{transformer_encoder_forward.1} parent=0 // loop_footer
    %s20 = sadd.s32 1, %s16
  $region7: #{transformer_encoder_forward.1} parent=0 // loop_footer_branch
    %15 = sbr.rel target = $region3
  $region8: #{transformer_encoder_forward.1} parent=0 // loop_exit
    _

</llo_original>
